<compile_context>
chip_gen: v7x
topology: tpu7x:2x2x1
jax: 0.10.0
libtpu: 0.0.40
codegen_flags: <defaults>
</compile_context>

<pallas_src>
import functools

import jax
import jax.numpy as jnp
from jax.experimental import pallas as pl
from jax.experimental.pallas import tpu as pltpu

EPS = 1e-5


# ----------------------------------------------------------------------------- utils
def _round_up(v, m):
    return (v + m - 1) // m * m


def _vmem_limit_bytes():
    """Generation-aware scoped-VMEM limit: ~75% of physical VMEM.

    v5e/v6e (128 MiB) -> ~96 MiB, v7x (64 MiB) -> 48 MiB.  Falls back to the
    conservative v7x figure if the hardware query is unavailable.
    """
    cap = 64 * 1024 * 1024
    try:
        info = pltpu.get_tpu_info()
        cap = int(getattr(info, "vmem_capacity_bytes", cap) or cap)
    except Exception:
        pass
    return min((cap * 3) // 4, 100 * 1024 * 1024)


def _pick_batch_block(n, l, cp, itemsize, budget_bytes):
    """Largest batch tile whose REAL per-step working set fits the VMEM budget.

    Models the worst stage (stage 2): double-buffered activation in/out blocks, the
    double-buffered (3*Cp, Cp) stacked weights (grid-invariant, but still pipelined),
    the f32 conv temporaries (h, prev, next, accumulator) and the lane-stacked
    compute-dtype matmul operand.
    """
    def est(nb_):
        rows = nb_ * l
        io = 4 * rows * cp * itemsize            # act in + act out, double-buffered
        w = 2 * 3 * cp * cp * itemsize           # stacked weights, double-buffered
        tmp = rows * cp * (16 + 6 * itemsize)    # f32 temps + stacked/cast copies
        return io + w + tmp + (2 << 20)          # stats/vec blocks + slack

    cands = [c for c in range(1, n + 1)
             if n % c == 0 and ((c * l) % 16 == 0 or c == n)]
    fitting = [c for c in cands if est(c) <= budget_bytes]
    if not fitting:
        # TODO(synk): pad N / emit a masked tail tile instead of one oversized block.
        return min(cands)
    best = max(fitting)
    # v7x megacore balance: prefer an even number of grid steps when the tile stays
    # within 2x of the largest fitting one (free on single-TC v5e/v6e).
    even = [c for c in fitting if (n // c) % 2 == 0 and 2 * c >= best]
    return max(even) if even else best


def _prep_conv_weight(w_oik, c, cp, dtype):
    """PyTorch (Cout, Cin, 3) conv weight -> input-stacked (3*Cp, Cp).

    Row k*Cp + i, column o holds w[o, i, k]; pairs with the lane-stacked
    [x[l-1], x[l], x[l+1]] conv operand.
    """
    w_kio = jnp.transpose(w_oik.astype(jnp.float32), (2, 1, 0))        # (3, Cin, Cout)
    w_pad = jnp.zeros((3, cp, cp), jnp.float32).at[:, :c, :c].set(w_kio)
    return w_pad.reshape(3 * cp, cp).astype(dtype)


def _fold_bn(part_sum, part_sq, count, gamma, beta, c, cp):
    """Fold training-mode BN into per-channel y = x*scale + offset (tiny (Cp,) math)."""
    # TODO(synk): mean-shifted per-tile partial sums for better E[x^2]-E[x]^2 stability.
    s = jnp.sum(part_sum, axis=(0, 1))                                 # (Cp,)
    sq = jnp.sum(part_sq, axis=(0, 1))
    mean = s / count
    var = jnp.maximum(sq / count - mean * mean, 0.0)                   # guard cancellation
    g = jnp.zeros((cp,), jnp.float32).at[:c].set(gamma.astype(jnp.float32))
    b = jnp.zeros((cp,), jnp.float32).at[:c].set(beta.astype(jnp.float32))
    scale = g * jax.lax.rsqrt(var + EPS)
    offset = b - mean * scale
    return scale.reshape(1, cp), offset.reshape(1, cp)


# --------------------------------------------------------------------------- kernels
def _conv3(h_f32, w_ref, length):
    """k=3 / pad=1 conv along L as ONE input-stacked MXU matmul.

    h_f32:  (rows, Cp) float32 activations, rows = (batch-major, position-minor).
    w_ref:  (3*Cp, Cp) stacked tap weights (row k*Cp + cin, col cout).  Conv biases
            are dropped: training-mode BN cancels any per-channel constant.
    Returns (rows, Cp) float32 = prev@W0 + cur@W1 + next@W2 in a single matmul, so
    the f32 MXU result is (rows, Cp) instead of (rows, 3*Cp) and the shifted
    temporaries feeding the MXU are compute-dtype.
    """
    rows, cp = h_f32.shape
    wd = w_ref.dtype
    zero_row = jnp.zeros((1, cp), jnp.float32)
    # Sublane row shifts on the f32 input (slice+concat kept for robust lowering;
    # pltpu.roll(axis=0) is the micro-upgrade once sublane rotate is verified here).
    prev = jnp.concatenate([zero_row, h_f32[:-1, :]], axis=0)          # prev[r] = h[r-1]
    nxt = jnp.concatenate([h_f32[1:, :], zero_row], axis=0)            # nxt[r]  = h[r+1]
    pos = jax.lax.broadcasted_iota(jnp.int32, (rows, 1), 0) % length
    prev = jnp.where(pos == 0, 0.0, prev)                              # left sequence edge
    nxt = jnp.where(pos == length - 1, 0.0, nxt)                       # right sequence edge
    stacked = jnp.concatenate(                                         # (rows, 3*Cp)
        [prev.astype(wd), h_f32.astype(wd), nxt.astype(wd)], axis=-1)
    return jnp.dot(stacked, w_ref[...], preferred_element_type=jnp.float32)


def _stage1_kernel(x_ref, w1_ref, y1_ref, s1_ref, q1_ref, *, length):
    c1 = _conv3(x_ref[...].astype(jnp.float32), w1_ref, length)        # (rows, Cp) f32
    y1_ref[...] = c1.astype(y1_ref.dtype)
    s1_ref[...] = jnp.sum(c1, axis=0, keepdims=True)[None]             # per-channel sum
    q1_ref[...] = jnp.sum(c1 * c1, axis=0, keepdims=True)[None]        # per-channel sumsq


def _stage2_kernel(y1_ref, sc1_ref, of1_ref, w2_ref, y2_ref, s2_ref, q2_ref, *, length):
    h = y1_ref[...].astype(jnp.float32)
    h = jnp.maximum(h * sc1_ref[...] + of1_ref[...], 0.0)              # folded BN1 + ReLU
    c2 = _conv3(h, w2_ref, length)
    y2_ref[...] = c2.astype(y2_ref.dtype)
    s2_ref[...] = jnp.sum(c2, axis=0, keepdims=True)[None]
    q2_ref[...] = jnp.sum(c2 * c2, axis=0, keepdims=True)[None]


def _stage3_kernel(y2_ref, x_ref, sc2_ref, of2_ref, o_ref):
    y2 = y2_ref[...].astype(jnp.float32)
    x = x_ref[...].astype(jnp.float32)
    o_ref[...] = jnp.maximum(y2 * sc2_ref[...] + of2_ref[...] + x, 0.0)


# --------------------------------------------------------------------------- wrapper
def residual_block(x_ncl, params, *, compute_dtype=jnp.bfloat16):
    """ResidualBlock forward (training-mode BatchNorm). NCL in / NCL out, f32."""
    N, C, L = x_ncl.shape
    Cp = _round_up(C, 128)                     # lane-dense channel axis
    # TODO(synk): small-C path (C<=32): keep channels on sublanes / L on lanes and do the
    # k=3 conv as lane-shift MACs instead of padding channels to 128.
    itemsize = jnp.dtype(compute_dtype).itemsize
    vmem_limit = _vmem_limit_bytes()
    Nb = _pick_batch_block(N, L, Cp, itemsize, int(vmem_limit * 0.85))
    nb = N // Nb
    rows_total, rows_blk = N * L, Nb * L
    count = float(N * L)

    # NCL -> (N*L, Cp): channels on lanes, zero-padded to a multiple of 128.
    # TODO(synk): fuse this relayout into stage 1 (take x with a (Nb, C, L) BlockSpec and
    # transpose/pad in-kernel) and fold the un-pad/transpose into stage 3's output to cut
    # two full HBM passes.
    # NOTE: in the bf16 fast path the residual is re-read from this bf16 copy; feed
    # stage 3 an f32 copy of x if skip-path accuracy matters.
    x_rows = jnp.transpose(x_ncl, (0, 2, 1)).reshape(rows_total, C)
    x_p = jnp.pad(x_rows, ((0, 0), (0, Cp - C))).astype(compute_dtype)

    w1 = _prep_conv_weight(params['w1'], C, Cp, compute_dtype)
    w2 = _prep_conv_weight(params['w2'], C, Cp, compute_dtype)

    act_spec = pl.BlockSpec((rows_blk, Cp), lambda i: (i, 0))
    stat_spec = pl.BlockSpec((1, 1, Cp), lambda i: (i, 0, 0))
    # Weight / scale-offset blocks are grid-invariant; their double buffer is small and
    # is accounted for in _pick_batch_block's budget.
    w_spec = pl.BlockSpec((3 * Cp, Cp), lambda i: (0, 0))
    vec_spec = pl.BlockSpec((1, Cp), lambda i: (0, 0))
    cparams = pltpu.CompilerParams(
        dimension_semantics=("parallel",),      # batch tiles shard across v7x's 2 TCs
        vmem_limit_bytes=int(vmem_limit))

    # stage 1: conv1 (bias folded away) + per-tile BN1 partial stats
    y1, s1, q1 = pl.pallas_call(
        functools.partial(_stage1_kernel, length=L),
        grid=(nb,),
        in_specs=[act_spec, w_spec],
        out_specs=(act_spec, stat_spec, stat_spec),
        out_shape=(jax.ShapeDtypeStruct((rows_total, Cp), compute_dtype),
                   jax.ShapeDtypeStruct((nb, 1, Cp), jnp.float32),
                   jax.ShapeDtypeStruct((nb, 1, Cp), jnp.float32)),
        compiler_params=cparams,
    )(x_p, w1)
    sc1, of1 = _fold_bn(s1, q1, count, params['g1'], params['be1'], C, Cp)

    # stage 2: BN1(scale/offset) + ReLU -> conv2 + per-tile BN2 partial stats
    y2, s2, q2 = pl.pallas_call(
        functools.partial(_stage2_kernel, length=L),
        grid=(nb,),
        in_specs=[act_spec, vec_spec, vec_spec, w_spec],
        out_specs=(act_spec, stat_spec, stat_spec),
        out_shape=(jax.ShapeDtypeStruct((rows_total, Cp), compute_dtype),
                   jax.ShapeDtypeStruct((nb, 1, Cp), jnp.float32),
                   jax.ShapeDtypeStruct((nb, 1, Cp), jnp.float32)),
        compiler_params=cparams,
    )(y1, sc1, of1, w2)
    sc2, of2 = _fold_bn(s2, q2, count, params['g2'], params['be2'], C, Cp)

    # stage 3: BN2(scale/offset) + residual add + ReLU
    # TODO(synk): emit compute_dtype here when the consumer tolerates it (halves the
    # largest HBM write); kept f32 to match the PyTorch module's output dtype.
    out_rows = pl.pallas_call(
        _stage3_kernel,
        grid=(nb,),
        in_specs=[act_spec, act_spec, vec_spec, vec_spec],
        out_specs=act_spec,
        out_shape=jax.ShapeDtypeStruct((rows_total, Cp), jnp.float32),
        compiler_params=cparams,
    )(y2, x_p, sc2, of2)

    # drop channel padding, back to PyTorch NCL layout
    return jnp.transpose(out_rows[:, :C].reshape(N, L, C), (0, 2, 1))


# ------------------------------------------------------------------------- reference
def residual_block_reference(x, params):
    """Pure-JAX reference (NCL layout) with PyTorch training-mode BN semantics."""
    def conv1d(inp, w, b):
        out = jax.lax.conv_general_dilated(
            inp, w, window_strides=(1,), padding=[(1, 1)],
            dimension_numbers=('NCW', 'OIW', 'NCW'))
        return out + b.reshape(1, -1, 1)

    def batchnorm(inp, g, be):
        mean = jnp.mean(inp, axis=(0, 2), keepdims=True)
        var = jnp.mean((inp - mean) ** 2, axis=(0, 2), keepdims=True)
        return (inp - mean) * jax.lax.rsqrt(var + EPS) \
               * g.reshape(1, -1, 1) + be.reshape(1, -1, 1)

    out = jnp.maximum(batchnorm(conv1d(x, params['w1'], params['b1']),
                                params['g1'], params['be1']), 0.0)
    out = batchnorm(conv1d(out, params['w2'], params['b2']),
                    params['g2'], params['be2']) + x
    return jnp.maximum(out, 0.0)


def init_params(key, channels):
    ks = jax.random.split(key, 8)
    bound = 1.0 / jnp.sqrt(channels * 3.0)     # PyTorch default conv init bound
    return {
        'w1': jax.random.uniform(ks[0], (channels, channels, 3), jnp.float32, -bound, bound),
        'b1': jax.random.uniform(ks[1], (channels,), jnp.float32, -bound, bound),
        'w2': jax.random.uniform(ks[2], (channels, channels, 3), jnp.float32, -bound, bound),
        'b2': jax.random.uniform(ks[3], (channels,), jnp.float32, -bound, bound),
        'g1': 1.0 + 0.1 * jax.random.normal(ks[4], (channels,), jnp.float32),
        'be1': 0.1 * jax.random.normal(ks[5], (channels,), jnp.float32),
        'g2': 1.0 + 0.1 * jax.random.normal(ks[6], (channels,), jnp.float32),
        'be2': 0.1 * jax.random.normal(ks[7], (channels,), jnp.float32),
    }


if __name__ == "__main__":
    key = jax.random.PRNGKey(0)
    k_x, k_p = jax.random.split(key)

    N, C, L = 2, 4, 16
    x = jax.random.normal(k_x, (N, C, L), jnp.float32)
    params = init_params(k_p, C)

    ref = residual_block_reference(x, params)

    # Exact-semantics path (f32 matmuls): tight check against the pure-JAX reference.
    run_f32 = jax.jit(functools.partial(residual_block, compute_dtype=jnp.float32))
    out_f32 = jax.block_until_ready(run_f32(x, params))
    assert out_f32.shape == (N, C, L)
    assert jnp.allclose(out_f32, ref, atol=1e-4, rtol=1e-4), "f32 kernel mismatch vs reference"

    # Fast path: bf16 MXU operands with f32 accumulation (looser tolerance).
    run_bf16 = jax.jit(functools.partial(residual_block, compute_dtype=jnp.bfloat16))
    out_bf16 = jax.block_until_ready(run_bf16(x, params))
    assert jnp.allclose(out_bf16, ref, atol=5e-2, rtol=5e-2), "bf16 kernel mismatch vs reference"

    print("KERNEL_OK")
</pallas_src>

<mosaic_0001>
module attributes {stable_mosaic.version = 11 : i64} {
  func.func @_stage1_kernel(%arg0: i32, %arg1: memref<16x128xf32, #tpu.memory_space<vmem>>, %arg2: memref<384x128xf32, #tpu.memory_space<vmem>>, %arg3: memref<16x128xf32, #tpu.memory_space<vmem>>, %arg4: memref<1x1x128xf32, #tpu.memory_space<vmem>>, %arg5: memref<1x1x128xf32, #tpu.memory_space<vmem>>) attributes {dimension_semantics = [#tpu.dimension_semantics<parallel>], iteration_bounds = array<i64: 2>, scalar_prefetch = 0 : i64, scratch_operands = 0 : i64, tpu.core_type = #tpu.core_type<tc>, window_params = [{transform_indices = @transform_0, window_bounds = array<i64: 16, 128>}, {pipeline_mode = #tpu.pipeline_mode<synchronous>, transform_indices = @transform_1, window_bounds = array<i64: 384, 128>}, {transform_indices = @transform_2, window_bounds = array<i64: 16, 128>}, {transform_indices = @transform_3, window_bounds = array<i64: 1, 1, 128>}, {transform_indices = @transform_4, window_bounds = array<i64: 1, 1, 128>}]} {
    %c0 = arith.constant 0 : index
    %c0_0 = arith.constant 0 : index
    %0 = vector.load %arg1[%c0, %c0_0] : memref<16x128xf32, #tpu.memory_space<vmem>>, vector<16x128xf32>
    %cst = arith.constant 0.000000e+00 : f32
    %1 = vector.broadcast %cst : f32 to vector<1x128xf32>
    %2 = vector.extract_strided_slice %0 {offsets = [0, 0], sizes = [15, 128], strides = [1, 1]} : vector<16x128xf32> to vector<15x128xf32>
    %3 = tpu.concatenate %1, %2 in 0 : vector<1x128xf32>, vector<15x128xf32> -> vector<16x128xf32>
    %4 = vector.extract_strided_slice %0 {offsets = [1, 0], sizes = [15, 128], strides = [1, 1]} : vector<16x128xf32> to vector<15x128xf32>
    %5 = tpu.concatenate %4, %1 in 0 : vector<15x128xf32>, vector<1x128xf32> -> vector<16x128xf32>
    %6 = tpu.iota {dimensions = array<i32: 0>} : vector<16x1xi32>
    %c16_i32 = arith.constant 16 : i32
    %c0_i32 = arith.constant 0 : i32
    %7 = arith.cmpi eq, %c16_i32, %c0_i32 : i32
    %c1_i32 = arith.constant 1 : i32
    %8 = arith.select %7, %c1_i32, %c16_i32 : i32
    %9 = vector.broadcast %8 : i32 to vector<16x1xi32>
    %10 = arith.remsi %6, %9 : vector<16x1xi32>
    %c0_i32_1 = arith.constant 0 : i32
    %11 = vector.broadcast %c0_i32_1 : i32 to vector<16x1xi32>
    %12 = arith.cmpi ne, %10, %11 : vector<16x1xi32>
    %c0_i32_2 = arith.constant 0 : i32
    %13 = vector.broadcast %c0_i32_2 : i32 to vector<16x1xi32>
    %14 = arith.cmpi slt, %10, %13 : vector<16x1xi32>
    %c0_i32_3 = arith.constant 0 : i32
    %15 = arith.cmpi slt, %8, %c0_i32_3 : i32
    %16 = vector.broadcast %15 : i1 to vector<16x1xi1>
    %17 = vector.broadcast %16 : vector<16x1xi1> to vector<16x1xi1>
    %18 = arith.xori %14, %17 : vector<16x1xi1>
    %19 = arith.andi %18, %12 : vector<16x1xi1>
    %20 = vector.broadcast %8 : i32 to vector<16x1xi32>
    %21 = arith.addi %10, %20 : vector<16x1xi32>
    %22 = arith.select %19, %21, %10 : vector<16x1xi1>, vector<16x1xi32>
    %c0_i32_4 = arith.constant 0 : i32
    %23 = vector.broadcast %c0_i32_4 : i32 to vector<16x1xi32>
    %24 = arith.cmpi eq, %22, %23 : vector<16x1xi32>
    %cst_5 = arith.constant 0.000000e+00 : f32
    %25 = vector.shape_cast %24 : vector<16x1xi1> to vector<16x1xi1>
    %26 = vector.broadcast %25 : vector<16x1xi1> to vector<16x128xi1>
    %27 = vector.broadcast %cst_5 : f32 to vector<16x128xf32>
    %28 = arith.select %26, %27, %3 : vector<16x128xi1>, vector<16x128xf32>
    %c15_i32 = arith.constant 15 : i32
    %29 = vector.broadcast %c15_i32 : i32 to vector<16x1xi32>
    %30 = arith.cmpi eq, %22, %29 : vector<16x1xi32>
    %cst_6 = arith.constant 0.000000e+00 : f32
    %31 = vector.shape_cast %30 : vector<16x1xi1> to vector<16x1xi1>
    %32 = vector.broadcast %31 : vector<16x1xi1> to vector<16x128xi1>
    %33 = vector.broadcast %cst_6 : f32 to vector<16x128xf32>
    %34 = arith.select %32, %33, %5 : vector<16x128xi1>, vector<16x128xf32>
    %35 = tpu.concatenate %28, %0, %34 in 1 : vector<16x128xf32>, vector<16x128xf32>, vector<16x128xf32> -> vector<16x384xf32>
    %c0_7 = arith.constant 0 : index
    %c0_8 = arith.constant 0 : index
    %36 = vector.load %arg2[%c0_7, %c0_8] : memref<384x128xf32, #tpu.memory_space<vmem>>, vector<384x128xf32>
    %cst_9 = arith.constant dense<0.000000e+00> : vector<16x128xf32>
    %37 = tpu.matmul %35, %36, %cst_9 {dimension_numbers = #tpu.dot_dimension_numbers<[1], [0], [0], [1], [0, 0, 1, 1], [], []>} : vector<16x384xf32>, vector<384x128xf32>, vector<16x128xf32> -> vector<16x128xf32>
    %c0_10 = arith.constant 0 : index
    %c0_11 = arith.constant 0 : index
    %38 = vector.load %arg3[%c0_10, %c0_11] : memref<16x128xf32, #tpu.memory_space<vmem>>, vector<16x128xf32>
    tpu.vector_store %arg3[%c0_10, %c0_11], %37 {strides = array<i32>} : memref<16x128xf32, #tpu.memory_space<vmem>>, vector<16x128xf32>,
    %cst_12 = arith.constant dense<0.000000e+00> : vector<128xf32>
    %39 = vector.multi_reduction <add>, %37, %cst_12 [0] : vector<16x128xf32> to vector<128xf32>
    %40 = vector.shape_cast %39 : vector<128xf32> to vector<1x128xf32>
    %41 = vector.shape_cast %40 : vector<1x128xf32> to vector<1x1x128xf32>
    %c0_13 = arith.constant 0 : index
    %c0_14 = arith.constant 0 : index
    %c0_15 = arith.constant 0 : index
    %42 = vector.load %arg4[%c0_13, %c0_14, %c0_15] : memref<1x1x128xf32, #tpu.memory_space<vmem>>, vector<1x1x128xf32>
    tpu.vector_store %arg4[%c0_13, %c0_14, %c0_15], %41 {strides = array<i32>} : memref<1x1x128xf32, #tpu.memory_space<vmem>>, vector<1x1x128xf32>,
    %43 = arith.mulf %37, %37 : vector<16x128xf32>
    %cst_16 = arith.constant dense<0.000000e+00> : vector<128xf32>
    %44 = vector.multi_reduction <add>, %43, %cst_16 [0] : vector<16x128xf32> to vector<128xf32>
    %45 = vector.shape_cast %44 : vector<128xf32> to vector<1x128xf32>
    %46 = vector.shape_cast %45 : vector<1x128xf32> to vector<1x1x128xf32>
    %c0_17 = arith.constant 0 : index
    %c0_18 = arith.constant 0 : index
    %c0_19 = arith.constant 0 : index
    %47 = vector.load %arg5[%c0_17, %c0_18, %c0_19] : memref<1x1x128xf32, #tpu.memory_space<vmem>>, vector<1x1x128xf32>
    tpu.vector_store %arg5[%c0_17, %c0_18, %c0_19], %46 {strides = array<i32>} : memref<1x1x128xf32, #tpu.memory_space<vmem>>, vector<1x1x128xf32>,
    return
  }
  func.func @transform_0(%arg0: i32) -> (i32, i32) {
    %c0_i32 = arith.constant 0 : i32
    %c0_i32_0 = arith.constant 0 : i32
    return %arg0, %c0_i32 : i32, i32
  }
  func.func @transform_1(%arg0: i32) -> (i32, i32) {
    %c0_i32 = arith.constant 0 : i32
    %c0_i32_0 = arith.constant 0 : i32
    %c0_i32_1 = arith.constant 0 : i32
    return %c0_i32, %c0_i32_0 : i32, i32
  }
  func.func @transform_2(%arg0: i32) -> (i32, i32) {
    %c0_i32 = arith.constant 0 : i32
    %c0_i32_0 = arith.constant 0 : i32
    return %arg0, %c0_i32 : i32, i32
  }
  func.func @transform_3(%arg0: i32) -> (i32, i32, i32) {
    %c0_i32 = arith.constant 0 : i32
    %c0_i32_0 = arith.constant 0 : i32
    %c0_i32_1 = arith.constant 0 : i32
    return %arg0, %c0_i32, %c0_i32_0 : i32, i32, i32
  }
  func.func @transform_4(%arg0: i32) -> (i32, i32, i32) {
    %c0_i32 = arith.constant 0 : i32
    %c0_i32_0 = arith.constant 0 : i32
    %c0_i32_1 = arith.constant 0 : i32
    return %arg0, %c0_i32, %c0_i32_0 : i32, i32, i32
  }
}

module attributes {stable_mosaic.version = 11 : i64} {
  func.func @_stage2_kernel(%arg0: i32, %arg1: memref<16x128xf32, #tpu.memory_space<vmem>>, %arg2: memref<1x128xf32, #tpu.memory_space<vmem>>, %arg3: memref<1x128xf32, #tpu.memory_space<vmem>>, %arg4: memref<384x128xf32, #tpu.memory_space<vmem>>, %arg5: memref<16x128xf32, #tpu.memory_space<vmem>>, %arg6: memref<1x1x128xf32, #tpu.memory_space<vmem>>, %arg7: memref<1x1x128xf32, #tpu.memory_space<vmem>>) attributes {dimension_semantics = [#tpu.dimension_semantics<parallel>], iteration_bounds = array<i64: 2>, scalar_prefetch = 0 : i64, scratch_operands = 0 : i64, tpu.core_type = #tpu.core_type<tc>, window_params = [{transform_indices = @transform_0, window_bounds = array<i64: 16, 128>}, {pipeline_mode = #tpu.pipeline_mode<synchronous>, transform_indices = @transform_1, window_bounds = array<i64: 1, 128>}, {pipeline_mode = #tpu.pipeline_mode<synchronous>, transform_indices = @transform_2, window_bounds = array<i64: 1, 128>}, {pipeline_mode = #tpu.pipeline_mode<synchronous>, transform_indices = @transform_3, window_bounds = array<i64: 384, 128>}, {transform_indices = @transform_4, window_bounds = array<i64: 16, 128>}, {transform_indices = @transform_5, window_bounds = array<i64: 1, 1, 128>}, {transform_indices = @transform_6, window_bounds = array<i64: 1, 1, 128>}]} {
    %c0 = arith.constant 0 : index
    %c0_0 = arith.constant 0 : index
    %0 = vector.load %arg1[%c0, %c0_0] : memref<16x128xf32, #tpu.memory_space<vmem>>, vector<16x128xf32>
    %c0_1 = arith.constant 0 : index
    %c0_2 = arith.constant 0 : index
    %1 = vector.load %arg2[%c0_1, %c0_2] : memref<1x128xf32, #tpu.memory_space<vmem>>, vector<1x128xf32>
    %2 = vector.broadcast %1 : vector<1x128xf32> to vector<16x128xf32>
    %3 = arith.mulf %0, %2 : vector<16x128xf32>
    %c0_3 = arith.constant 0 : index
    %c0_4 = arith.constant 0 : index
    %4 = vector.load %arg3[%c0_3, %c0_4] : memref<1x128xf32, #tpu.memory_space<vmem>>, vector<1x128xf32>
    %5 = vector.broadcast %4 : vector<1x128xf32> to vector<16x128xf32>
    %6 = arith.addf %3, %5 : vector<16x128xf32>
    %cst = arith.constant 0.000000e+00 : f32
    %7 = vector.broadcast %cst : f32 to vector<16x128xf32>
    %8 = arith.maximumf %6, %7 : vector<16x128xf32>
    %cst_5 = arith.constant 0.000000e+00 : f32
    %9 = vector.broadcast %cst_5 : f32 to vector<1x128xf32>
    %10 = vector.extract_strided_slice %8 {offsets = [0, 0], sizes = [15, 128], strides = [1, 1]} : vector<16x128xf32> to vector<15x128xf32>
    %11 = tpu.concatenate %9, %10 in 0 : vector<1x128xf32>, vector<15x128xf32> -> vector<16x128xf32>
    %12 = vector.extract_strided_slice %8 {offsets = [1, 0], sizes = [15, 128], strides = [1, 1]} : vector<16x128xf32> to vector<15x128xf32>
    %13 = tpu.concatenate %12, %9 in 0 : vector<15x128xf32>, vector<1x128xf32> -> vector<16x128xf32>
    %14 = tpu.iota {dimensions = array<i32: 0>} : vector<16x1xi32>
    %c16_i32 = arith.constant 16 : i32
    %c0_i32 = arith.constant 0 : i32
    %15 = arith.cmpi eq, %c16_i32, %c0_i32 : i32
    %c1_i32 = arith.constant 1 : i32
    %16 = arith.select %15, %c1_i32, %c16_i32 : i32
    %17 = vector.broadcast %16 : i32 to vector<16x1xi32>
    %18 = arith.remsi %14, %17 : vector<16x1xi32>
    %c0_i32_6 = arith.constant 0 : i32
    %19 = vector.broadcast %c0_i32_6 : i32 to vector<16x1xi32>
    %20 = arith.cmpi ne, %18, %19 : vector<16x1xi32>
    %c0_i32_7 = arith.constant 0 : i32
    %21 = vector.broadcast %c0_i32_7 : i32 to vector<16x1xi32>
    %22 = arith.cmpi slt, %18, %21 : vector<16x1xi32>
    %c0_i32_8 = arith.constant 0 : i32
    %23 = arith.cmpi slt, %16, %c0_i32_8 : i32
    %24 = vector.broadcast %23 : i1 to vector<16x1xi1>
    %25 = vector.broadcast %24 : vector<16x1xi1> to vector<16x1xi1>
    %26 = arith.xori %22, %25 : vector<16x1xi1>
    %27 = arith.andi %26, %20 : vector<16x1xi1>
    %28 = vector.broadcast %16 : i32 to vector<16x1xi32>
    %29 = arith.addi %18, %28 : vector<16x1xi32>
    %30 = arith.select %27, %29, %18 : vector<16x1xi1>, vector<16x1xi32>
    %c0_i32_9 = arith.constant 0 : i32
    %31 = vector.broadcast %c0_i32_9 : i32 to vector<16x1xi32>
    %32 = arith.cmpi eq, %30, %31 : vector<16x1xi32>
    %cst_10 = arith.constant 0.000000e+00 : f32
    %33 = vector.shape_cast %32 : vector<16x1xi1> to vector<16x1xi1>
    %34 = vector.broadcast %33 : vector<16x1xi1> to vector<16x128xi1>
    %35 = vector.broadcast %cst_10 : f32 to vector<16x128xf32>
    %36 = arith.select %34, %35, %11 : vector<16x128xi1>, vector<16x128xf32>
    %c15_i32 = arith.constant 15 : i32
    %37 = vector.broadcast %c15_i32 : i32 to vector<16x1xi32>
    %38 = arith.cmpi eq, %30, %37 : vector<16x1xi32>
    %cst_11 = arith.constant 0.000000e+00 : f32
    %39 = vector.shape_cast %38 : vector<16x1xi1> to vector<16x1xi1>
    %40 = vector.broadcast %39 : vector<16x1xi1> to vector<16x128xi1>
    %41 = vector.broadcast %cst_11 : f32 to vector<16x128xf32>
    %42 = arith.select %40, %41, %13 : vector<16x128xi1>, vector<16x128xf32>
    %43 = tpu.concatenate %36, %8, %42 in 1 : vector<16x128xf32>, vector<16x128xf32>, vector<16x128xf32> -> vector<16x384xf32>
    %c0_12 = arith.constant 0 : index
    %c0_13 = arith.constant 0 : index
    %44 = vector.load %arg4[%c0_12, %c0_13] : memref<384x128xf32, #tpu.memory_space<vmem>>, vector<384x128xf32>
    %cst_14 = arith.constant dense<0.000000e+00> : vector<16x128xf32>
    %45 = tpu.matmul %43, %44, %cst_14 {dimension_numbers = #tpu.dot_dimension_numbers<[1], [0], [0], [1], [0, 0, 1, 1], [], []>} : vector<16x384xf32>, vector<384x128xf32>, vector<16x128xf32> -> vector<16x128xf32>
    %c0_15 = arith.constant 0 : index
    %c0_16 = arith.constant 0 : index
    %46 = vector.load %arg5[%c0_15, %c0_16] : memref<16x128xf32, #tpu.memory_space<vmem>>, vector<16x128xf32>
    tpu.vector_store %arg5[%c0_15, %c0_16], %45 {strides = array<i32>} : memref<16x128xf32, #tpu.memory_space<vmem>>, vector<16x128xf32>,
    %cst_17 = arith.constant dense<0.000000e+00> : vector<128xf32>
    %47 = vector.multi_reduction <add>, %45, %cst_17 [0] : vector<16x128xf32> to vector<128xf32>
    %48 = vector.shape_cast %47 : vector<128xf32> to vector<1x128xf32>
    %49 = vector.shape_cast %48 : vector<1x128xf32> to vector<1x1x128xf32>
    %c0_18 = arith.constant 0 : index
    %c0_19 = arith.constant 0 : index
    %c0_20 = arith.constant 0 : index
    %50 = vector.load %arg6[%c0_18, %c0_19, %c0_20] : memref<1x1x128xf32, #tpu.memory_space<vmem>>, vector<1x1x128xf32>
    tpu.vector_store %arg6[%c0_18, %c0_19, %c0_20], %49 {strides = array<i32>} : memref<1x1x128xf32, #tpu.memory_space<vmem>>, vector<1x1x128xf32>,
    %51 = arith.mulf %45, %45 : vector<16x128xf32>
    %cst_21 = arith.constant dense<0.000000e+00> : vector<128xf32>
    %52 = vector.multi_reduction <add>, %51, %cst_21 [0] : vector<16x128xf32> to vector<128xf32>
    %53 = vector.shape_cast %52 : vector<128xf32> to vector<1x128xf32>
    %54 = vector.shape_cast %53 : vector<1x128xf32> to vector<1x1x128xf32>
    %c0_22 = arith.constant 0 : index
    %c0_23 = arith.constant 0 : index
    %c0_24 = arith.constant 0 : index
    %55 = vector.load %arg7[%c0_22, %c0_23, %c0_24] : memref<1x1x128xf32, #tpu.memory_space<vmem>>, vector<1x1x128xf32>
    tpu.vector_store %arg7[%c0_22, %c0_23, %c0_24], %54 {strides = array<i32>} : memref<1x1x128xf32, #tpu.memory_space<vmem>>, vector<1x1x128xf32>,
    return
  }
  func.func @transform_0(%arg0: i32) -> (i32, i32) {
    %c0_i32 = arith.constant 0 : i32
    %c0_i32_0 = arith.constant 0 : i32
    return %arg0, %c0_i32 : i32, i32
  }
  func.func @transform_1(%arg0: i32) -> (i32, i32) {
    %c0_i32 = arith.constant 0 : i32
    %c0_i32_0 = arith.constant 0 : i32
    %c0_i32_1 = arith.constant 0 : i32
    return %c0_i32, %c0_i32_0 : i32, i32
  }
  func.func @transform_2(%arg0: i32) -> (i32, i32) {
    %c0_i32 = arith.constant 0 : i32
    %c0_i32_0 = arith.constant 0 : i32
    %c0_i32_1 = arith.constant 0 : i32
    return %c0_i32, %c0_i32_0 : i32, i32
  }
  func.func @transform_3(%arg0: i32) -> (i32, i32) {
    %c0_i32 = arith.constant 0 : i32
    %c0_i32_0 = arith.constant 0 : i32
    %c0_i32_1 = arith.constant 0 : i32
    return %c0_i32, %c0_i32_0 : i32, i32
  }
  func.func @transform_4(%arg0: i32) -> (i32, i32) {
    %c0_i32 = arith.constant 0 : i32
    %c0_i32_0 = arith.constant 0 : i32
    return %arg0, %c0_i32 : i32, i32
  }
  func.func @transform_5(%arg0: i32) -> (i32, i32, i32) {
    %c0_i32 = arith.constant 0 : i32
    %c0_i32_0 = arith.constant 0 : i32
    %c0_i32_1 = arith.constant 0 : i32
    return %arg0, %c0_i32, %c0_i32_0 : i32, i32, i32
  }
  func.func @transform_6(%arg0: i32) -> (i32, i32, i32) {
    %c0_i32 = arith.constant 0 : i32
    %c0_i32_0 = arith.constant 0 : i32
    %c0_i32_1 = arith.constant 0 : i32
    return %arg0, %c0_i32, %c0_i32_0 : i32, i32, i32
  }
}

module attributes {stable_mosaic.version = 11 : i64} {
  func.func @_stage3_kernel(%arg0: i32, %arg1: memref<16x128xf32, #tpu.memory_space<vmem>>, %arg2: memref<16x128xf32, #tpu.memory_space<vmem>>, %arg3: memref<1x128xf32, #tpu.memory_space<vmem>>, %arg4: memref<1x128xf32, #tpu.memory_space<vmem>>, %arg5: memref<16x128xf32, #tpu.memory_space<vmem>>) attributes {dimension_semantics = [#tpu.dimension_semantics<parallel>], iteration_bounds = array<i64: 2>, scalar_prefetch = 0 : i64, scratch_operands = 0 : i64, tpu.core_type = #tpu.core_type<tc>, window_params = [{transform_indices = @transform_0, window_bounds = array<i64: 16, 128>}, {transform_indices = @transform_1, window_bounds = array<i64: 16, 128>}, {pipeline_mode = #tpu.pipeline_mode<synchronous>, transform_indices = @transform_2, window_bounds = array<i64: 1, 128>}, {pipeline_mode = #tpu.pipeline_mode<synchronous>, transform_indices = @transform_3, window_bounds = array<i64: 1, 128>}, {transform_indices = @transform_4, window_bounds = array<i64: 16, 128>}]} {
    %c0 = arith.constant 0 : index
    %c0_0 = arith.constant 0 : index
    %0 = vector.load %arg1[%c0, %c0_0] : memref<16x128xf32, #tpu.memory_space<vmem>>, vector<16x128xf32>
    %c0_1 = arith.constant 0 : index
    %c0_2 = arith.constant 0 : index
    %1 = vector.load %arg2[%c0_1, %c0_2] : memref<16x128xf32, #tpu.memory_space<vmem>>, vector<16x128xf32>
    %c0_3 = arith.constant 0 : index
    %c0_4 = arith.constant 0 : index
    %2 = vector.load %arg3[%c0_3, %c0_4] : memref<1x128xf32, #tpu.memory_space<vmem>>, vector<1x128xf32>
    %3 = vector.broadcast %2 : vector<1x128xf32> to vector<16x128xf32>
    %4 = arith.mulf %0, %3 : vector<16x128xf32>
    %c0_5 = arith.constant 0 : index
    %c0_6 = arith.constant 0 : index
    %5 = vector.load %arg4[%c0_5, %c0_6] : memref<1x128xf32, #tpu.memory_space<vmem>>, vector<1x128xf32>
    %6 = vector.broadcast %5 : vector<1x128xf32> to vector<16x128xf32>
    %7 = arith.addf %4, %6 : vector<16x128xf32>
    %8 = arith.addf %7, %1 : vector<16x128xf32>
    %cst = arith.constant 0.000000e+00 : f32
    %9 = vector.broadcast %cst : f32 to vector<16x128xf32>
    %10 = arith.maximumf %8, %9 : vector<16x128xf32>
    %c0_7 = arith.constant 0 : index
    %c0_8 = arith.constant 0 : index
    %11 = vector.load %arg5[%c0_7, %c0_8] : memref<16x128xf32, #tpu.memory_space<vmem>>, vector<16x128xf32>
    tpu.vector_store %arg5[%c0_7, %c0_8], %10 {strides = array<i32>} : memref<16x128xf32, #tpu.memory_space<vmem>>, vector<16x128xf32>,
    return
  }
  func.func @transform_0(%arg0: i32) -> (i32, i32) {
    %c0_i32 = arith.constant 0 : i32
    %c0_i32_0 = arith.constant 0 : i32
    return %arg0, %c0_i32 : i32, i32
  }
  func.func @transform_1(%arg0: i32) -> (i32, i32) {
    %c0_i32 = arith.constant 0 : i32
    %c0_i32_0 = arith.constant 0 : i32
    return %arg0, %c0_i32 : i32, i32
  }
  func.func @transform_2(%arg0: i32) -> (i32, i32) {
    %c0_i32 = arith.constant 0 : i32
    %c0_i32_0 = arith.constant 0 : i32
    %c0_i32_1 = arith.constant 0 : i32
    return %c0_i32, %c0_i32_0 : i32, i32
  }
  func.func @transform_3(%arg0: i32) -> (i32, i32) {
    %c0_i32 = arith.constant 0 : i32
    %c0_i32_0 = arith.constant 0 : i32
    %c0_i32_1 = arith.constant 0 : i32
    return %c0_i32, %c0_i32_0 : i32, i32
  }
  func.func @transform_4(%arg0: i32) -> (i32, i32) {
    %c0_i32 = arith.constant 0 : i32
    %c0_i32_0 = arith.constant 0 : i32
    return %arg0, %c0_i32 : i32, i32
  }
}

</mosaic_0001>

<llo_original>
// kernel: residual_block.5
$region0: #{residual_block.5}
  #allocation0 [shape = 'u32[]', space=smem, size = 0x4, offset = 0x4, fixed_abs, tag = 'smem constant byte address 0x4 - core index']
  #allocation1 [shape = 'u32[144,128]{1,0:T(1,128)}', space=vmem, size = 0x12000, scoped, tag = 'internal scratch']
  %s0 = inlined_call_operand.vmem [shape: f32[32,128], index: 0, kind: input, shape index: {}]
  %s1 = inlined_call_operand.vmem [shape: f32[32,128], index: 1, kind: input, shape index: {}]
  %s2 = inlined_call_operand.vmem [shape: f32[1,128], index: 2, kind: input, shape index: {}]
  %s3 = inlined_call_operand.vmem [shape: f32[1,128], index: 3, kind: input, shape index: {}]
  %s4 = inlined_call_operand.vmem [shape: f32[32,128], index: 4, kind: output, shape index: {}]
  %s5 = sld [smem:[#allocation0]]
  $region49: #{residual_block.5} parent=0
    _
  %s7 = ssub.s32 1, %s5
  %s8 = scalar_select 0, %s7, %s5
  loop: start=0, step=1, limit=4
  $region2: #{residual_block.5} parent=0 // loop_pre_header
    _
  $region3: #{residual_block.5} parent=0 // loop_header
    %s10 = sphi 0, %s14
    %p11 = scmp.ge.s32.totalorder %s10, 4
    %s20 = sphi 0, %s22
    %s23 = sphi 0, %s20
    %s24 = sphi 0, %s23
    %s40 = sphi 0, %s24
    %s46 = sphi 0, %s48
    %s49 = sphi 0, %s46
    %s50 = sphi 0, %s49
    %s66 = sphi 0, %s50
    %s70 = sphi 0, %s70
    %s72 = sphi 0, %s70
    %s73 = sphi 0, %s72
    %s87 = sphi 0, %s73
    %s91 = sphi 0, %s91
    %s93 = sphi 0, %s91
    %s94 = sphi 0, %s93
    %s108 = sphi 0, %s94
    %s114 = sphi 0, %s116
    %s117 = sphi 0, %s114
    %s118 = sphi 0, %s117
    %s134 = sphi 0, %s118
  $region4: #{residual_block.5} parent=0 // loop_header_branch
    %13 = sbr.rel (%p11) target = $region8
  $region5: #{residual_block.5} parent=0 // loop_body
    %s15 = ssub.s32 %s10, 1
    %s16 = ssub.s32 %s10, 2
    %s17 = sadd.s32 %s10, 1
    %s18 = ssub.s32 %s10, %s17
    %p19 = scmp.eq.s32.totalorder %s18, 0
    %s21 = sadd.s32 %s20, 1
    %s22 = scalar_select %p19, %s20, %s21
    %p25 = pneg %p19
    %p26 = scmp.eq.s32.totalorder %s10, 1
    %p27 = por %p25, %p26
    %p28 = scmp.ne.s32.totalorder %s20, %s23
    %p29 = scmp.eq.s32.totalorder %s10, 0
    %p30 = por %p28, %p29
    %p31 = scmp.ne.s32.totalorder %s20, %s23
    %p32 = scmp.eq.s32.totalorder %s15, 1
    %p33 = por %p31, %p32
    %p34 = scmp.ne.s32.totalorder %s23, %s24
    %p35 = scmp.eq.s32.totalorder %s15, 0
    %p36 = por %p34, %p35
    %p37 = scmp.ne.s32.totalorder %s23, %s24
    %p38 = scmp.eq.s32.totalorder %s16, 1
    %p39 = por %p37, %p38
    %p41 = scmp.ne.s32.totalorder %s24, %s40
    %p42 = scmp.eq.s32.totalorder %s16, 0
    %p43 = por %p41, %p42
    %s44 = ssub.s32 %s10, %s17
    %p45 = scmp.eq.s32.totalorder %s44, 0
    %s47 = sadd.s32 %s46, 1
    %s48 = scalar_select %p45, %s46, %s47
    %p51 = pneg %p45
    %p52 = scmp.eq.s32.totalorder %s10, 1
    %p53 = por %p51, %p52
    %p54 = scmp.ne.s32.totalorder %s46, %s49
    %p55 = scmp.eq.s32.totalorder %s10, 0
    %p56 = por %p54, %p55
    %p57 = scmp.ne.s32.totalorder %s46, %s49
    %p58 = scmp.eq.s32.totalorder %s15, 1
    %p59 = por %p57, %p58
    %p60 = scmp.ne.s32.totalorder %s49, %s50
    %p61 = scmp.eq.s32.totalorder %s15, 0
    %p62 = por %p60, %p61
    %p63 = scmp.ne.s32.totalorder %s49, %s50
    %p64 = scmp.eq.s32.totalorder %s16, 1
    %p65 = por %p63, %p64
    %p67 = scmp.ne.s32.totalorder %s50, %s66
    %p68 = scmp.eq.s32.totalorder %s16, 0
    %p69 = por %p67, %p68
    %s71 = sadd.s32 %s70, 1
    %p74 = scmp.eq.s32.totalorder %s10, 1
    %p75 = scmp.ne.s32.totalorder %s70, %s72
    %p76 = scmp.eq.s32.totalorder %s10, 0
    %p77 = por %p75, %p76
    %p78 = scmp.ne.s32.totalorder %s70, %s72
    %p79 = scmp.eq.s32.totalorder %s15, 1
    %p80 = por %p78, %p79
    %p81 = scmp.ne.s32.totalorder %s72, %s73
    %p82 = scmp.eq.s32.totalorder %s15, 0
    %p83 = por %p81, %p82
    %p84 = scmp.ne.s32.totalorder %s72, %s73
    %p85 = scmp.eq.s32.totalorder %s16, 1
    %p86 = por %p84, %p85
    %p88 = scmp.ne.s32.totalorder %s73, %s87
    %p89 = scmp.eq.s32.totalorder %s16, 0
    %p90 = por %p88, %p89
    %s92 = sadd.s32 %s91, 1
    %p95 = scmp.eq.s32.totalorder %s10, 1
    %p96 = scmp.ne.s32.totalorder %s91, %s93
    %p97 = scmp.eq.s32.totalorder %s10, 0
    %p98 = por %p96, %p97
    %p99 = scmp.ne.s32.totalorder %s91, %s93
    %p100 = scmp.eq.s32.totalorder %s15, 1
    %p101 = por %p99, %p100
    %p102 = scmp.ne.s32.totalorder %s93, %s94
    %p103 = scmp.eq.s32.totalorder %s15, 0
    %p104 = por %p102, %p103
    %p105 = scmp.ne.s32.totalorder %s93, %s94
    %p106 = scmp.eq.s32.totalorder %s16, 1
    %p107 = por %p105, %p106
    %p109 = scmp.ne.s32.totalorder %s94, %s108
    %p110 = scmp.eq.s32.totalorder %s16, 0
    %p111 = por %p109, %p110
    %s112 = ssub.s32 %s10, %s17
    %p113 = scmp.eq.s32.totalorder %s112, 0
    %s115 = sadd.s32 %s114, 1
    %s116 = scalar_select %p113, %s114, %s115
    %p119 = pneg %p113
    %p120 = scmp.eq.s32.totalorder %s10, 1
    %p121 = por %p119, %p120
    %p122 = scmp.ne.s32.totalorder %s114, %s117
    %p123 = scmp.eq.s32.totalorder %s10, 0
    %p124 = por %p122, %p123
    %p125 = scmp.ne.s32.totalorder %s114, %s117
    %p126 = scmp.eq.s32.totalorder %s15, 1
    %p127 = por %p125, %p126
    %p128 = scmp.ne.s32.totalorder %s117, %s118
    %p129 = scmp.eq.s32.totalorder %s15, 0
    %p130 = por %p128, %p129
    %p131 = scmp.ne.s32.totalorder %s117, %s118
    %p132 = scmp.eq.s32.totalorder %s16, 1
    %p133 = por %p131, %p132
    %p135 = scmp.ne.s32.totalorder %s118, %s134
    %p136 = scmp.eq.s32.totalorder %s16, 0
    %p137 = por %p135, %p136
    %p138 = scmp.le.s32.totalorder 1, %s10
    %p139 = scmp.lt.s32.totalorder %s10, 3
    %p140 = pnand %p138, %p139
    %p141 = pneg %p140
    // Predicated region
    $region9: #{residual_block.5} parent=5 // pred_check
      _
    $region10: #{residual_block.5} parent=5 // pred_check_branch
      %143 = sbr.rel (%p140) target = $region12
    $region11: #{residual_block.5} parent=5 // pred_region
      %s144 = ssub.s32 %s10, 1
      // Predicated region
      $region13: #{residual_block.5} parent=11 // pred_check
        %p145 = pneg %p83
      $region14: #{residual_block.5} parent=11 // pred_check_branch
        %147 = sbr.rel (%p145) target = $region16
      $region15: #{residual_block.5} parent=11 // pred_region
        _
      $region16: #{residual_block.5} parent=11 // pred_fallthru
        _
      // Predicated region
      $region17: #{residual_block.5} parent=11 // pred_check
        %p148 = pneg %p104
      $region18: #{residual_block.5} parent=11 // pred_check_branch
        %150 = sbr.rel (%p148) target = $region20
      $region19: #{residual_block.5} parent=11 // pred_region
        _
      $region20: #{residual_block.5} parent=11 // pred_fallthru
        _
    $region12: #{residual_block.5} parent=5 // pred_fallthru
      _
    %p151 = scmp.lt.s32.totalorder %s10, 2
    // Predicated region
    $region21: #{residual_block.5} parent=5 // pred_check
      %p152 = pneg %p151
    $region22: #{residual_block.5} parent=5 // pred_check_branch
      %154 = sbr.rel (%p152) target = $region24
    $region23: #{residual_block.5} parent=5 // pred_region
      // Predicated region
      $region25: #{residual_block.5} parent=23 // pred_check
        %p155 = pneg %p30
      $region26: #{residual_block.5} parent=23 // pred_check_branch
        %157 = sbr.rel (%p155) target = $region28
      $region27: #{residual_block.5} parent=23 // pred_region
        %s158 = smul.u32 2, %s10
        %p159 = scmp.lt.s32.totalorder %s158, 3
        %s160 = scalar_select %p159, %s158, 3
        %s161 = smul.addr %s160, 8
        %s162 = scalar_lea.vmem %s0, %s161
        %s163 = smul.u32 2, %s10
      $region28: #{residual_block.5} parent=23 // pred_fallthru
        _
      // Predicated region
      $region29: #{residual_block.5} parent=23 // pred_check
        %p164 = pneg %p56
      $region30: #{residual_block.5} parent=23 // pred_check_branch
        %166 = sbr.rel (%p164) target = $region32
      $region31: #{residual_block.5} parent=23 // pred_region
        %s167 = smul.u32 2, %s10
        %p168 = scmp.lt.s32.totalorder %s167, 3
        %s169 = scalar_select %p168, %s167, 3
        %s170 = smul.addr %s169, 8
        %s171 = scalar_lea.vmem %s1, %s170
        %s172 = smul.u32 2, %s10
      $region32: #{residual_block.5} parent=23 // pred_fallthru
        _
    $region24: #{residual_block.5} parent=5 // pred_fallthru
      _
    %p173 = scmp.le.s32.totalorder 1, %s10
    %p174 = scmp.lt.s32.totalorder %s10, 3
    %p175 = pnand %p173, %p174
    %p176 = pneg %p175
    // Predicated region
    $region33: #{residual_block.5} parent=5 // pred_check
      _
    $region34: #{residual_block.5} parent=5 // pred_check_branch
      %178 = sbr.rel (%p175) target = $region36
    $region35: #{residual_block.5} parent=5 // pred_region
      %s179 = ssub.s32 %s10, 1
      %s180 = smul.u32 2, %s15
      %p181 = scmp.lt.s32.totalorder %s180, 3
      %s182 = scalar_select %p181, %s180, 3
      %s183 = smul.addr %s182, 8
      %s184 = scalar_lea.vmem %s0, %s183
      %p185 = pneg %p36
      %p186 = pneg %p33
      %s187 = smul.u32 2, %s15
      %p188 = scmp.lt.s32.totalorder %s187, 3
      %s189 = scalar_select %p188, %s187, 3
      %s190 = smul.addr %s189, 8
      %s191 = scalar_lea.vmem %s1, %s190
      %p192 = pneg %p62
      %p193 = pneg %p59
      %p194 = pneg %p83
      %p195 = pneg %p80
      %p196 = pneg %p104
      %p197 = pneg %p101
      %p198 = pneg %p130
      %p199 = pneg %p127
      %s200 = smul.u32 2, %s15
      %p201 = scmp.lt.s32.totalorder %s200, 3
      %s202 = scalar_select %p201, %s200, 3
      %s203 = smul.addr %s202, 8
      %s204 = scalar_lea.vmem %s4, %s203
      %s205 = smul.u32 2, %s15
      %p206 = scmp.lt.s32.totalorder %s205, 3
      %s207 = scalar_select %p206, %s205, 3
      %s208 = smul.addr %s207, 8
      %s209 = scalar_lea.vmem %s0, %s208
      %s210 = smul.u32 2, %s15
      %s211 = smul.u32 2, %s15
      %p212 = scmp.lt.s32.totalorder %s211, 3
      %s213 = scalar_select %p212, %s211, 3
      %s214 = smul.addr %s213, 8
      %s215 = scalar_lea.vmem %s1, %s214
      %s216 = smul.u32 2, %s15
      %s217 = smul.u32 2, %s15
      %p218 = scmp.lt.s32.totalorder %s217, 3
      %s219 = scalar_select %p218, %s217, 3
      %s220 = smul.addr %s219, 8
      %s221 = scalar_lea.vmem %s4, %s220
      %s222 = smul.u32 2, %s15
      %v223 = vld [vmem:[%s209] sm:$0xff]
      %v224 = vld [vmem:[%s209 + $0x8] sm:$0xff]
      %v225 = vld [vmem:[%s215] sm:$0xff]
      %v226 = vld [vmem:[%s215 + $0x8] sm:$0xff]
      %v227 = vld [vmem:[%s2] sm:$0x1]
      %v229 = vlaneseq
      %v230 = vshrl.u32 %v229, 7
      %v231 = vsub.s32 0, %v230
      %v232 = vrot.slane %v227, %v231
      %v234 = vmul.f32 %v223, %v232
      %v235 = vmul.f32 %v224, %v232
      %v236 = vld [vmem:[%s3] sm:$0x1]
      %v238 = vlaneseq
      %v239 = vshrl.u32 %v238, 7
      %v240 = vsub.s32 0, %v239
      %v241 = vrot.slane %v236, %v240
      %v243 = vadd.f32 %v234, %v241
      %v244 = vadd.f32 %v235, %v241
      %v245 = vadd.f32 %v243, %v225
      %v246 = vadd.f32 %v244, %v226
      %v247 = vmax.f32 %v245, 0.0
      %v248 = vmax.f32 %v246, 0.0
      %249 = vst [vmem:[%s221] sm:$0xff] %v247
      %250 = vst [vmem:[%s221 + $0x8] sm:$0xff] %v248
      %s251 = smul.u32 2, %s15
      %p252 = scmp.lt.s32.totalorder %s251, 3
      %s253 = scalar_select %p252, %s251, 3
      %s254 = smul.addr %s253, 8
      %s255 = scalar_lea.vmem %s4, %s254
      // Predicated region
      $region37: #{residual_block.5} parent=35 // pred_check
        %p256 = pneg %p127
      $region38: #{residual_block.5} parent=35 // pred_check_branch
        %258 = sbr.rel (%p256) target = $region40
      $region39: #{residual_block.5} parent=35 // pred_region
        %s259 = smul.u32 2, %s15
      $region40: #{residual_block.5} parent=35 // pred_fallthru
        _
    $region36: #{residual_block.5} parent=5 // pred_fallthru
      _
    %p260 = scmp.le.s32.totalorder 2, %s10
    // Predicated region
    $region41: #{residual_block.5} parent=5 // pred_check
      %p261 = pneg %p260
    $region42: #{residual_block.5} parent=5 // pred_check_branch
      %263 = sbr.rel (%p261) target = $region44
    $region43: #{residual_block.5} parent=5 // pred_region
      %s264 = ssub.s32 %s10, 2
      // Predicated region
      $region45: #{residual_block.5} parent=43 // pred_check
        %p265 = pneg %p133
      $region46: #{residual_block.5} parent=43 // pred_check_branch
        %267 = sbr.rel (%p265) target = $region48
      $region47: #{residual_block.5} parent=43 // pred_region
        %s268 = smul.u32 2, %s16
        %p269 = scmp.lt.s32.totalorder %s268, 3
        %s270 = scalar_select %p269, %s268, 3
        %s271 = smul.addr %s270, 8
        %s272 = scalar_lea.vmem %s4, %s271
      $region48: #{residual_block.5} parent=43 // pred_fallthru
        _
    $region44: #{residual_block.5} parent=5 // pred_fallthru
      _
  $region6: #{residual_block.5} parent=0 // loop_footer
    %s14 = sadd.s32 1, %s10
  $region7: #{residual_block.5} parent=0 // loop_footer_branch
    %9 = sbr.rel target = $region3
  $region8: #{residual_block.5} parent=0 // loop_exit
    _

// kernel: residual_block.3
$region0: #{residual_block.3}
  #allocation0 [shape = 'u32[]', space=smem, size = 0x4, offset = 0x4, fixed_abs, tag = 'smem constant byte address 0x4 - core index']
  #allocation1 [shape = 'u32[144,128]{1,0:T(1,128)}', space=vmem, size = 0x12000, scoped, tag = 'internal scratch']
  %s0 = inlined_call_operand.vmem [shape: f32[32,128], index: 0, kind: input, shape index: {}]
  %s1 = inlined_call_operand.vmem [shape: f32[384,128], index: 1, kind: input, shape index: {}]
  %s2 = inlined_call_operand.vmem [shape: f32[32,128], index: 2, kind: output, shape index: {0}]
  %s3 = inlined_call_operand.vmem [shape: f32[2,1,128], index: 3, kind: output, shape index: {1}]
  %s4 = inlined_call_operand.vmem [shape: f32[2,1,128], index: 4, kind: output, shape index: {2}]
  %5 = xla_tuple %s2, %s3, %s4
  %s6 = sld [smem:[#allocation0]]
  $region57: #{residual_block.3} parent=0
    _
  %s8 = ssub.s32 1, %s6
  %s9 = scalar_select 0, %s8, %s6
  loop: start=0, step=1, limit=4
  $region2: #{residual_block.3} parent=0 // loop_pre_header
    _
  $region3: #{residual_block.3} parent=0 // loop_header
    %s11 = sphi 0, %s15
    %p12 = scmp.ge.s32.totalorder %s11, 4
    %s21 = sphi 0, %s23
    %s24 = sphi 0, %s21
    %s25 = sphi 0, %s24
    %s41 = sphi 0, %s25
    %s45 = sphi 0, %s45
    %s47 = sphi 0, %s45
    %s48 = sphi 0, %s47
    %s62 = sphi 0, %s48
    %s68 = sphi 0, %s70
    %s71 = sphi 0, %s68
    %s72 = sphi 0, %s71
    %s88 = sphi 0, %s72
    %s94 = sphi 0, %s96
    %s97 = sphi 0, %s94
    %s98 = sphi 0, %s97
    %s114 = sphi 0, %s98
    %s120 = sphi 0, %s122
    %s123 = sphi 0, %s120
    %s124 = sphi 0, %s123
    %s140 = sphi 0, %s124
  $region4: #{residual_block.3} parent=0 // loop_header_branch
    %14 = sbr.rel (%p12) target = $region8
  $region5: #{residual_block.3} parent=0 // loop_body
    %s16 = ssub.s32 %s11, 1
    %s17 = ssub.s32 %s11, 2
    %s18 = sadd.s32 %s11, 1
    %s19 = ssub.s32 %s11, %s18
    %p20 = scmp.eq.s32.totalorder %s19, 0
    %s22 = sadd.s32 %s21, 1
    %s23 = scalar_select %p20, %s21, %s22
    %p26 = pneg %p20
    %p27 = scmp.eq.s32.totalorder %s11, 1
    %p28 = por %p26, %p27
    %p29 = scmp.ne.s32.totalorder %s21, %s24
    %p30 = scmp.eq.s32.totalorder %s11, 0
    %p31 = por %p29, %p30
    %p32 = scmp.ne.s32.totalorder %s21, %s24
    %p33 = scmp.eq.s32.totalorder %s16, 1
    %p34 = por %p32, %p33
    %p35 = scmp.ne.s32.totalorder %s24, %s25
    %p36 = scmp.eq.s32.totalorder %s16, 0
    %p37 = por %p35, %p36
    %p38 = scmp.ne.s32.totalorder %s24, %s25
    %p39 = scmp.eq.s32.totalorder %s17, 1
    %p40 = por %p38, %p39
    %p42 = scmp.ne.s32.totalorder %s25, %s41
    %p43 = scmp.eq.s32.totalorder %s17, 0
    %p44 = por %p42, %p43
    %s46 = sadd.s32 %s45, 1
    %p49 = scmp.eq.s32.totalorder %s11, 1
    %p50 = scmp.ne.s32.totalorder %s45, %s47
    %p51 = scmp.eq.s32.totalorder %s11, 0
    %p52 = por %p50, %p51
    %p53 = scmp.ne.s32.totalorder %s45, %s47
    %p54 = scmp.eq.s32.totalorder %s16, 1
    %p55 = por %p53, %p54
    %p56 = scmp.ne.s32.totalorder %s47, %s48
    %p57 = scmp.eq.s32.totalorder %s16, 0
    %p58 = por %p56, %p57
    %p59 = scmp.ne.s32.totalorder %s47, %s48
    %p60 = scmp.eq.s32.totalorder %s17, 1
    %p61 = por %p59, %p60
    %p63 = scmp.ne.s32.totalorder %s48, %s62
    %p64 = scmp.eq.s32.totalorder %s17, 0
    %p65 = por %p63, %p64
    %s66 = ssub.s32 %s11, %s18
    %p67 = scmp.eq.s32.totalorder %s66, 0
    %s69 = sadd.s32 %s68, 1
    %s70 = scalar_select %p67, %s68, %s69
    %p73 = pneg %p67
    %p74 = scmp.eq.s32.totalorder %s11, 1
    %p75 = por %p73, %p74
    %p76 = scmp.ne.s32.totalorder %s68, %s71
    %p77 = scmp.eq.s32.totalorder %s11, 0
    %p78 = por %p76, %p77
    %p79 = scmp.ne.s32.totalorder %s68, %s71
    %p80 = scmp.eq.s32.totalorder %s16, 1
    %p81 = por %p79, %p80
    %p82 = scmp.ne.s32.totalorder %s71, %s72
    %p83 = scmp.eq.s32.totalorder %s16, 0
    %p84 = por %p82, %p83
    %p85 = scmp.ne.s32.totalorder %s71, %s72
    %p86 = scmp.eq.s32.totalorder %s17, 1
    %p87 = por %p85, %p86
    %p89 = scmp.ne.s32.totalorder %s72, %s88
    %p90 = scmp.eq.s32.totalorder %s17, 0
    %p91 = por %p89, %p90
    %s92 = ssub.s32 %s11, %s18
    %p93 = scmp.eq.s32.totalorder %s92, 0
    %s95 = sadd.s32 %s94, 1
    %s96 = scalar_select %p93, %s94, %s95
    %p99 = pneg %p93
    %p100 = scmp.eq.s32.totalorder %s11, 1
    %p101 = por %p99, %p100
    %p102 = scmp.ne.s32.totalorder %s94, %s97
    %p103 = scmp.eq.s32.totalorder %s11, 0
    %p104 = por %p102, %p103
    %p105 = scmp.ne.s32.totalorder %s94, %s97
    %p106 = scmp.eq.s32.totalorder %s16, 1
    %p107 = por %p105, %p106
    %p108 = scmp.ne.s32.totalorder %s97, %s98
    %p109 = scmp.eq.s32.totalorder %s16, 0
    %p110 = por %p108, %p109
    %p111 = scmp.ne.s32.totalorder %s97, %s98
    %p112 = scmp.eq.s32.totalorder %s17, 1
    %p113 = por %p111, %p112
    %p115 = scmp.ne.s32.totalorder %s98, %s114
    %p116 = scmp.eq.s32.totalorder %s17, 0
    %p117 = por %p115, %p116
    %s118 = ssub.s32 %s11, %s18
    %p119 = scmp.eq.s32.totalorder %s118, 0
    %s121 = sadd.s32 %s120, 1
    %s122 = scalar_select %p119, %s120, %s121
    %p125 = pneg %p119
    %p126 = scmp.eq.s32.totalorder %s11, 1
    %p127 = por %p125, %p126
    %p128 = scmp.ne.s32.totalorder %s120, %s123
    %p129 = scmp.eq.s32.totalorder %s11, 0
    %p130 = por %p128, %p129
    %p131 = scmp.ne.s32.totalorder %s120, %s123
    %p132 = scmp.eq.s32.totalorder %s16, 1
    %p133 = por %p131, %p132
    %p134 = scmp.ne.s32.totalorder %s123, %s124
    %p135 = scmp.eq.s32.totalorder %s16, 0
    %p136 = por %p134, %p135
    %p137 = scmp.ne.s32.totalorder %s123, %s124
    %p138 = scmp.eq.s32.totalorder %s17, 1
    %p139 = por %p137, %p138
    %p141 = scmp.ne.s32.totalorder %s124, %s140
    %p142 = scmp.eq.s32.totalorder %s17, 0
    %p143 = por %p141, %p142
    %p144 = scmp.le.s32.totalorder 1, %s11
    %p145 = scmp.lt.s32.totalorder %s11, 3
    %p146 = pnand %p144, %p145
    %p147 = pneg %p146
    // Predicated region
    $region9: #{residual_block.3} parent=5 // pred_check
      _
    $region10: #{residual_block.3} parent=5 // pred_check_branch
      %149 = sbr.rel (%p146) target = $region12
    $region11: #{residual_block.3} parent=5 // pred_region
      %s150 = ssub.s32 %s11, 1
      // Predicated region
      $region13: #{residual_block.3} parent=11 // pred_check
        %p151 = pneg %p58
      $region14: #{residual_block.3} parent=11 // pred_check_branch
        %153 = sbr.rel (%p151) target = $region16
      $region15: #{residual_block.3} parent=11 // pred_region
        _
      $region16: #{residual_block.3} parent=11 // pred_fallthru
        _
    $region12: #{residual_block.3} parent=5 // pred_fallthru
      _
    %p154 = scmp.lt.s32.totalorder %s11, 2
    // Predicated region
    $region17: #{residual_block.3} parent=5 // pred_check
      %p155 = pneg %p154
    $region18: #{residual_block.3} parent=5 // pred_check_branch
      %157 = sbr.rel (%p155) target = $region20
    $region19: #{residual_block.3} parent=5 // pred_region
      // Predicated region
      $region21: #{residual_block.3} parent=19 // pred_check
        %p158 = pneg %p31
      $region22: #{residual_block.3} parent=19 // pred_check_branch
        %160 = sbr.rel (%p158) target = $region24
      $region23: #{residual_block.3} parent=19 // pred_region
        %s161 = smul.u32 2, %s11
        %p162 = scmp.lt.s32.totalorder %s161, 3
        %s163 = scalar_select %p162, %s161, 3
        %s164 = smul.addr %s163, 8
        %s165 = scalar_lea.vmem %s0, %s164
        %s166 = smul.u32 2, %s11
      $region24: #{residual_block.3} parent=19 // pred_fallthru
        _
    $region20: #{residual_block.3} parent=5 // pred_fallthru
      _
    %p167 = scmp.le.s32.totalorder 1, %s11
    %p168 = scmp.lt.s32.totalorder %s11, 3
    %p169 = pnand %p167, %p168
    %p170 = pneg %p169
    // Predicated region
    $region25: #{residual_block.3} parent=5 // pred_check
      _
    $region26: #{residual_block.3} parent=5 // pred_check_branch
      %172 = sbr.rel (%p169) target = $region28
    $region27: #{residual_block.3} parent=5 // pred_region
      %s173 = ssub.s32 %s11, 1
      %s174 = smul.u32 2, %s16
      %p175 = scmp.lt.s32.totalorder %s174, 3
      %s176 = scalar_select %p175, %s174, 3
      %s177 = smul.addr %s176, 8
      %s178 = scalar_lea.vmem %s0, %s177
      %p179 = pneg %p37
      %p180 = pneg %p34
      %p181 = pneg %p58
      %p182 = pneg %p55
      %p183 = pneg %p84
      %p184 = pneg %p81
      %s185 = smul.u32 2, %s16
      %p186 = scmp.lt.s32.totalorder %s185, 3
      %s187 = scalar_select %p186, %s185, 3
      %s188 = smul.addr %s187, 8
      %s189 = scalar_lea.vmem %s2, %s188
      %p190 = pneg %p110
      %p191 = pneg %p107
      %p192 = scmp.lt.s32.totalorder %s16, 1
      %s193 = scalar_select %p192, %s16, 1
      %s194 = scalar_lea.vmem %s3, %s193
      %p195 = pneg %p136
      %p196 = pneg %p133
      %p197 = scmp.lt.s32.totalorder %s16, 1
      %s198 = scalar_select %p197, %s16, 1
      %s199 = scalar_lea.vmem %s4, %s198
      %s200 = smul.u32 2, %s16
      %p201 = scmp.lt.s32.totalorder %s200, 3
      %s202 = scalar_select %p201, %s200, 3
      %s203 = smul.addr %s202, 8
      %s204 = scalar_lea.vmem %s0, %s203
      %s205 = smul.u32 2, %s16
      %s206 = smul.u32 2, %s16
      %p207 = scmp.lt.s32.totalorder %s206, 3
      %s208 = scalar_select %p207, %s206, 3
      %s209 = smul.addr %s208, 8
      %s210 = scalar_lea.vmem %s2, %s209
      %s211 = smul.u32 2, %s16
      %p212 = scmp.lt.s32.totalorder %s16, 1
      %s213 = scalar_select %p212, %s16, 1
      %s214 = scalar_lea.vmem %s3, %s213
      %p215 = scmp.lt.s32.totalorder %s16, 1
      %s216 = scalar_select %p215, %s16, 1
      %s217 = scalar_lea.vmem %s4, %s216
      %v218 = vld [vmem:[%s204] sm:$0xff]
      %v219 = vld [vmem:[%s204 + $0x8] sm:$0xff]
      %vm222 = vcmask 1040384
      %v223 = vrot.slane %v218, 7
      %v224 = vrot.slane %v219, 7
      %v225 = vsel %vm222, %v223, %v224
      %v228 = vsel %vm222, 0.0, %v223
      %vm229 = vcmask 1046528
      %v230 = vrot.slane %v218, 1
      %v231 = vrot.slane %v219, 1
      %v232 = vsel %vm229, %v230, %v231
      %v235 = vsel %vm229, %v231, 0.0
      %v236 = vlaneseq
      %v237 = vshrl.u32 %v236, 7
      %v238 = vadd.s32 %v237, 8
      %vm239 = vcmp.lt.s32.totalorder %v237, 0
      %v240 = vsub.s32 0, %v237
      %v241 = vsel %vm239, %v240, %v237
      %v242 = vshrl.u32 %v241, 4
      %v243 = vand.u32 %v241, 15
      %v244 = vsub.s32 0, %v243
      %v245 = vsel %vm239, %v244, %v243
      %vm246 = vcmp.lt.s32.totalorder %v238, 0
      %v247 = vsub.s32 0, %v238
      %v248 = vsel %vm246, %v247, %v238
      %v249 = vshrl.u32 %v248, 4
      %v250 = vand.u32 %v248, 15
      %v251 = vsub.s32 0, %v250
      %v252 = vsel %vm246, %v251, %v250
      %vm253 = vcmp.ne.s32.totalorder %v245, 0
      %vm254 = vcmp.ne.s32.totalorder %v252, 0
      %vm255 = vcmp.lt.s32.totalorder %v245, 0
      %vm256 = vcmp.lt.s32.totalorder %v252, 0
      %vm257 = vmand %vm255, %vm253
      %vm258 = vmand %vm256, %vm254
      %v259 = vadd.s32 %v245, 16
      %v260 = vadd.s32 %v252, 16
      %v261 = vsel %vm257, %v259, %v245
      %v262 = vsel %vm258, %v260, %v252
      %vm263 = vcmp.eq.s32.totalorder %v261, 0
      %vm264 = vcmp.eq.s32.totalorder %v262, 0
      %v265 = vsel %vm263, 1, 0
      %v266 = vsel %vm264, 1, 0
      %vm267 = vcmp.eq.s32.totalorder %v265, 1
      %vm268 = vcmp.eq.s32.totalorder %v266, 1
      %v269 = vsel %vm267, 0.0, %v228
      %v270 = vsel %vm268, 0.0, %v225
      %vm271 = vcmp.eq.s32.totalorder %v261, 15
      %vm272 = vcmp.eq.s32.totalorder %v262, 15
      %v273 = vsel %vm271, 1, 0
      %v274 = vsel %vm272, 1, 0
      %vm275 = vcmp.eq.s32.totalorder %v273, 1
      %vm276 = vcmp.eq.s32.totalorder %v274, 1
      %v277 = vsel %vm275, 0.0, %v232
      %v278 = vsel %vm276, 0.0, %v235
      %v279 = vld [vmem:[%s1] sm:$0xff]
      %v280 = vld [vmem:[%s1 + $0x8] sm:$0xff]
      %v281 = vld [vmem:[%s1 + $0x10] sm:$0xff]
      %v282 = vld [vmem:[%s1 + $0x18] sm:$0xff]
      %v283 = vld [vmem:[%s1 + $0x20] sm:$0xff]
      %v284 = vld [vmem:[%s1 + $0x28] sm:$0xff]
      %v285 = vld [vmem:[%s1 + $0x30] sm:$0xff]
      %v286 = vld [vmem:[%s1 + $0x38] sm:$0xff]
      %v287 = vld [vmem:[%s1 + $0x40] sm:$0xff]
      %v288 = vld [vmem:[%s1 + $0x48] sm:$0xff]
      %v289 = vld [vmem:[%s1 + $0x50] sm:$0xff]
      %v290 = vld [vmem:[%s1 + $0x58] sm:$0xff]
      %v291 = vld [vmem:[%s1 + $0x60] sm:$0xff]
      %v292 = vld [vmem:[%s1 + $0x68] sm:$0xff]
      %v293 = vld [vmem:[%s1 + $0x70] sm:$0xff]
      %v294 = vld [vmem:[%s1 + $0x78] sm:$0xff]
      %v295 = vld [vmem:[%s1 + $0x80] sm:$0xff]
      %v296 = vld [vmem:[%s1 + $0x88] sm:$0xff]
      %v297 = vld [vmem:[%s1 + $0x90] sm:$0xff]
      %v298 = vld [vmem:[%s1 + $0x98] sm:$0xff]
      %v299 = vld [vmem:[%s1 + $0xa0] sm:$0xff]
      %v300 = vld [vmem:[%s1 + $0xa8] sm:$0xff]
      %v301 = vld [vmem:[%s1 + $0xb0] sm:$0xff]
      %v302 = vld [vmem:[%s1 + $0xb8] sm:$0xff]
      %v303 = vld [vmem:[%s1 + $0xc0] sm:$0xff]
      %v304 = vld [vmem:[%s1 + $0xc8] sm:$0xff]
      %v305 = vld [vmem:[%s1 + $0xd0] sm:$0xff]
      %v306 = vld [vmem:[%s1 + $0xd8] sm:$0xff]
      %v307 = vld [vmem:[%s1 + $0xe0] sm:$0xff]
      %v308 = vld [vmem:[%s1 + $0xe8] sm:$0xff]
      %v309 = vld [vmem:[%s1 + $0xf0] sm:$0xff]
      %v310 = vld [vmem:[%s1 + $0xf8] sm:$0xff]
      %v311 = vld [vmem:[%s1 + $0x100] sm:$0xff]
      %v312 = vld [vmem:[%s1 + $0x108] sm:$0xff]
      %v313 = vld [vmem:[%s1 + $0x110] sm:$0xff]
      %v314 = vld [vmem:[%s1 + $0x118] sm:$0xff]
      %v315 = vld [vmem:[%s1 + $0x120] sm:$0xff]
      %v316 = vld [vmem:[%s1 + $0x128] sm:$0xff]
      %v317 = vld [vmem:[%s1 + $0x130] sm:$0xff]
      %v318 = vld [vmem:[%s1 + $0x138] sm:$0xff]
      %v319 = vld [vmem:[%s1 + $0x140] sm:$0xff]
      %v320 = vld [vmem:[%s1 + $0x148] sm:$0xff]
      %v321 = vld [vmem:[%s1 + $0x150] sm:$0xff]
      %v322 = vld [vmem:[%s1 + $0x158] sm:$0xff]
      %v323 = vld [vmem:[%s1 + $0x160] sm:$0xff]
      %v324 = vld [vmem:[%s1 + $0x168] sm:$0xff]
      %v325 = vld [vmem:[%s1 + $0x170] sm:$0xff]
      %v326 = vld [vmem:[%s1 + $0x178] sm:$0xff]
      %327 = vmatprep.subr.mxu0 0.0
      %328 = vmatpush1.msra.mxu0 %v279
      %329 = vmatprep.subr.mxu0 0.0
      %330 = vmatpush1.msra.mxu0 %v280
      %331 = vmatprep.subr.mxu0 0.0
      %332 = vmatpush1.msra.mxu0 %v281
      %333 = vmatprep.subr.mxu0 0.0
      %334 = vmatpush1.msra.mxu0 %v282
      %335 = vmatprep.subr.mxu0 0.0
      %336 = vmatpush1.msra.mxu0 %v283
      %337 = vmatprep.subr.mxu0 0.0
      %338 = vmatpush1.msra.mxu0 %v284
      %339 = vmatprep.subr.mxu0 0.0
      %340 = vmatpush1.msra.mxu0 %v285
      %341 = vmatprep.subr.mxu0 0.0
      %342 = vmatpush1.msra.mxu0 %v286
      %343 = vmatprep.subr.mxu0 0.0
      %344 = vmatpush1.msra.mxu0 %v287
      %345 = vmatprep.subr.mxu0 0.0
      %346 = vmatpush1.msra.mxu0 %v288
      %347 = vmatprep.subr.mxu0 0.0
      %348 = vmatpush1.msra.mxu0 %v289
      %349 = vmatprep.subr.mxu0 0.0
      %350 = vmatpush1.msra.mxu0 %v290
      %351 = vmatprep.subr.mxu0 0.0
      %352 = vmatpush1.msra.mxu0 %v291
      %353 = vmatprep.subr.mxu0 0.0
      %354 = vmatpush1.msra.mxu0 %v292
      %355 = vmatprep.subr.mxu0 0.0
      %356 = vmatpush1.msra.mxu0 %v293
      %357 = vmatprep.subr.mxu0 0.0
      %358 = vmatpush1.msra.mxu0 %v294
      %359 = vmatprep.subr.mxu0 0.0
      %360 = vmatpush1.msra.mxu0 %v295
      %361 = vmatprep.subr.mxu0 0.0
      %362 = vmatpush1.msra.mxu0 %v296
      %363 = vmatprep.subr.mxu0 0.0
      %364 = vmatpush1.msra.mxu0 %v297
      %365 = vmatprep.subr.mxu0 0.0
      %366 = vmatpush1.msra.mxu0 %v298
      %367 = vmatprep.subr.mxu0 0.0
      %368 = vmatpush1.msra.mxu0 %v299
      %369 = vmatprep.subr.mxu0 0.0
      %370 = vmatpush1.msra.mxu0 %v300
      %371 = vmatprep.subr.mxu0 0.0
      %372 = vmatpush1.msra.mxu0 %v301
      %373 = vmatprep.subr.mxu0 0.0
      %374 = vmatpush1.msra.mxu0 %v302
      %375 = vmatprep.subr.mxu0 0.0
      %376 = vmatpush1.msra.mxu0 %v303
      %377 = vmatprep.subr.mxu0 0.0
      %378 = vmatpush1.msra.mxu0 %v304
      %379 = vmatprep.subr.mxu0 0.0
      %380 = vmatpush1.msra.mxu0 %v305
      %381 = vmatprep.subr.mxu0 0.0
      %382 = vmatpush1.msra.mxu0 %v306
      %383 = vmatprep.subr.mxu0 0.0
      %384 = vmatpush1.msra.mxu0 %v307
      %385 = vmatprep.subr.mxu0 0.0
      %386 = vmatpush1.msra.mxu0 %v308
      %387 = vmatprep.subr.mxu0 0.0
      %388 = vmatpush1.msra.mxu0 %v309
      %389 = vmatprep.subr.mxu0 0.0
      %390 = vmatpush1.msra.mxu0 %v310
      %391 = vmatprep.mubr.f32.mxu0 %v218
      %392 = vmatmul.mubr.f32.gmra.mrb[0].mxu0 %v269
      %v393 = vpop.f32.mrb[0].mxu0
      %v394 = vadd.f32 0.0, %v393
      %v395 = vpop.f32.mrb[0].mxu0
      %396 = vmatprep.mubr.f32.mxu0 %v219
      %397 = vmatmul.mubr.f32.gmra.mrb[0].mxu0 %v270
      %v398 = vpop.f32.mrb[0].mxu0
      %v399 = vadd.f32 0.0, %v398
      %v400 = vpop.f32.mrb[0].mxu0
      %401 = vdwg.mxu0
      %402 = vmatprep.subr.mxu0 0.0
      %403 = vmatpush1.msra.mxu0 %v311
      %404 = vmatprep.subr.mxu0 0.0
      %405 = vmatpush1.msra.mxu0 %v312
      %406 = vmatprep.subr.mxu0 0.0
      %407 = vmatpush1.msra.mxu0 %v313
      %408 = vmatprep.subr.mxu0 0.0
      %409 = vmatpush1.msra.mxu0 %v314
      %410 = vmatprep.subr.mxu0 0.0
      %411 = vmatpush1.msra.mxu0 %v315
      %412 = vmatprep.subr.mxu0 0.0
      %413 = vmatpush1.msra.mxu0 %v316
      %414 = vmatprep.subr.mxu0 0.0
      %415 = vmatpush1.msra.mxu0 %v317
      %416 = vmatprep.subr.mxu0 0.0
      %417 = vmatpush1.msra.mxu0 %v318
      %418 = vmatprep.subr.mxu0 0.0
      %419 = vmatpush1.msra.mxu0 %v319
      %420 = vmatprep.subr.mxu0 0.0
      %421 = vmatpush1.msra.mxu0 %v320
      %422 = vmatprep.subr.mxu0 0.0
      %423 = vmatpush1.msra.mxu0 %v321
      %424 = vmatprep.subr.mxu0 0.0
      %425 = vmatpush1.msra.mxu0 %v322
      %426 = vmatprep.subr.mxu0 0.0
      %427 = vmatpush1.msra.mxu0 %v323
      %428 = vmatprep.subr.mxu0 0.0
      %429 = vmatpush1.msra.mxu0 %v324
      %430 = vmatprep.subr.mxu0 0.0
      %431 = vmatpush1.msra.mxu0 %v325
      %432 = vmatprep.subr.mxu0 0.0
      %433 = vmatpush1.msra.mxu0 %v326
      %434 = vmatprep.subr.mxu0 0.0
      %435 = vmatpush1.msra.mxu0 0.0
      %436 = vmatprep.subr.mxu0 0.0
      %437 = vmatpush1.msra.mxu0 0.0
      %438 = vmatprep.subr.mxu0 0.0
      %439 = vmatpush1.msra.mxu0 0.0
      %440 = vmatprep.subr.mxu0 0.0
      %441 = vmatpush1.msra.mxu0 0.0
      %442 = vmatprep.subr.mxu0 0.0
      %443 = vmatpush1.msra.mxu0 0.0
      %444 = vmatprep.subr.mxu0 0.0
      %445 = vmatpush1.msra.mxu0 0.0
      %446 = vmatprep.subr.mxu0 0.0
      %447 = vmatpush1.msra.mxu0 0.0
      %448 = vmatprep.subr.mxu0 0.0
      %449 = vmatpush1.msra.mxu0 0.0
      %450 = vmatprep.subr.mxu0 0.0
      %451 = vmatpush1.msra.mxu0 0.0
      %452 = vmatprep.subr.mxu0 0.0
      %453 = vmatpush1.msra.mxu0 0.0
      %454 = vmatprep.subr.mxu0 0.0
      %455 = vmatpush1.msra.mxu0 0.0
      %456 = vmatprep.subr.mxu0 0.0
      %457 = vmatpush1.msra.mxu0 0.0
      %458 = vmatprep.subr.mxu0 0.0
      %459 = vmatpush1.msra.mxu0 0.0
      %460 = vmatprep.subr.mxu0 0.0
      %461 = vmatpush1.msra.mxu0 0.0
      %462 = vmatprep.subr.mxu0 0.0
      %463 = vmatpush1.msra.mxu0 0.0
      %464 = vmatprep.subr.mxu0 0.0
      %465 = vmatpush1.msra.mxu0 0.0
      %466 = vmatprep.mubr.f32.mxu0 0.0
      %467 = vmatmul.mubr.f32.gmra.mrb[0].mxu0 %v277
      %v468 = vpop.f32.mrb[0].mxu0
      %v469 = vadd.f32 %v394, %v468
      %v470 = vpop.f32.mrb[0].mxu0
      %471 = vmatprep.mubr.f32.mxu0 0.0
      %472 = vmatmul.mubr.f32.gmra.mrb[0].mxu0 %v278
      %v473 = vpop.f32.mrb[0].mxu0
      %v474 = vadd.f32 %v399, %v473
      %v475 = vpop.f32.mrb[0].mxu0
      %476 = vdwg.mxu0
      %477 = vst [vmem:[%s210] sm:$0xff] %v469
      %478 = vst [vmem:[%s210 + $0x8] sm:$0xff] %v474
      %v479 = vadd.f32 %v469, %v474
      %v480 = vrot.slane %v479, 4
      %v481 = vadd.f32 %v479, %v480
      %v482 = vrot.slane %v481, 2
      %v483 = vadd.f32 %v481, %v482
      %v484 = vrot.slane %v483, 1
      %v485 = vadd.f32 %v483, %v484
      %486 = vst [vmem:[%s214] sm:$0x1] %v485
      %v487 = vmul.f32 %v469, %v469
      %v488 = vmul.f32 %v474, %v474
      %v489 = vadd.f32 %v487, %v488
      %v490 = vrot.slane %v489, 4
      %v491 = vadd.f32 %v489, %v490
      %v492 = vrot.slane %v491, 2
      %v493 = vadd.f32 %v491, %v492
      %v494 = vrot.slane %v493, 1
      %v495 = vadd.f32 %v493, %v494
      %496 = vst [vmem:[%s217] sm:$0x1] %v495
      %s497 = smul.u32 2, %s16
      %p498 = scmp.lt.s32.totalorder %s497, 3
      %s499 = scalar_select %p498, %s497, 3
      %s500 = smul.addr %s499, 8
      %s501 = scalar_lea.vmem %s2, %s500
      %p502 = scmp.lt.s32.totalorder %s16, 1
      %s503 = scalar_select %p502, %s16, 1
      %s504 = scalar_lea.vmem %s3, %s503
      %p505 = scmp.lt.s32.totalorder %s16, 1
      %s506 = scalar_select %p505, %s16, 1
      %s507 = scalar_lea.vmem %s4, %s506
      // Predicated region
      $region29: #{residual_block.3} parent=27 // pred_check
        %p508 = pneg %p81
      $region30: #{residual_block.3} parent=27 // pred_check_branch
        %510 = sbr.rel (%p508) target = $region32
      $region31: #{residual_block.3} parent=27 // pred_region
        %s511 = smul.u32 2, %s16
      $region32: #{residual_block.3} parent=27 // pred_fallthru
        _
      // Predicated region
      $region33: #{residual_block.3} parent=27 // pred_check
        %p512 = pneg %p107
      $region34: #{residual_block.3} parent=27 // pred_check_branch
        %514 = sbr.rel (%p512) target = $region36
      $region35: #{residual_block.3} parent=27 // pred_region
        _
      $region36: #{residual_block.3} parent=27 // pred_fallthru
        _
      // Predicated region
      $region37: #{residual_block.3} parent=27 // pred_check
        %p515 = pneg %p133
      $region38: #{residual_block.3} parent=27 // pred_check_branch
        %517 = sbr.rel (%p515) target = $region40
      $region39: #{residual_block.3} parent=27 // pred_region
        _
      $region40: #{residual_block.3} parent=27 // pred_fallthru
        _
    $region28: #{residual_block.3} parent=5 // pred_fallthru
      _
    %p518 = scmp.le.s32.totalorder 2, %s11
    // Predicated region
    $region41: #{residual_block.3} parent=5 // pred_check
      %p519 = pneg %p518
    $region42: #{residual_block.3} parent=5 // pred_check_branch
      %521 = sbr.rel (%p519) target = $region44
    $region43: #{residual_block.3} parent=5 // pred_region
      %s522 = ssub.s32 %s11, 2
      // Predicated region
      $region45: #{residual_block.3} parent=43 // pred_check
        %p523 = pneg %p87
      $region46: #{residual_block.3} parent=43 // pred_check_branch
        %525 = sbr.rel (%p523) target = $region48
      $region47: #{residual_block.3} parent=43 // pred_region
        %s526 = smul.u32 2, %s17
        %p527 = scmp.lt.s32.totalorder %s526, 3
        %s528 = scalar_select %p527, %s526, 3
        %s529 = smul.addr %s528, 8
        %s530 = scalar_lea.vmem %s2, %s529
      $region48: #{residual_block.3} parent=43 // pred_fallthru
        _
      // Predicated region
      $region49: #{residual_block.3} parent=43 // pred_check
        %p531 = pneg %p113
      $region50: #{residual_block.3} parent=43 // pred_check_branch
        %533 = sbr.rel (%p531) target = $region52
      $region51: #{residual_block.3} parent=43 // pred_region
        %p534 = scmp.lt.s32.totalorder %s17, 1
        %s535 = scalar_select %p534, %s17, 1
        %s536 = scalar_lea.vmem %s3, %s535
      $region52: #{residual_block.3} parent=43 // pred_fallthru
        _
      // Predicated region
      $region53: #{residual_block.3} parent=43 // pred_check
        %p537 = pneg %p139
      $region54: #{residual_block.3} parent=43 // pred_check_branch
        %539 = sbr.rel (%p537) target = $region56
      $region55: #{residual_block.3} parent=43 // pred_region
        %p540 = scmp.lt.s32.totalorder %s17, 1
        %s541 = scalar_select %p540, %s17, 1
        %s542 = scalar_lea.vmem %s4, %s541
      $region56: #{residual_block.3} parent=43 // pred_fallthru
        _
    $region44: #{residual_block.3} parent=5 // pred_fallthru
      _
  $region6: #{residual_block.3} parent=0 // loop_footer
    %s15 = sadd.s32 1, %s11
  $region7: #{residual_block.3} parent=0 // loop_footer_branch
    %10 = sbr.rel target = $region3
  $region8: #{residual_block.3} parent=0 // loop_exit
    _

// kernel: residual_block.4
$region0: #{residual_block.4}
  #allocation0 [shape = 'u32[]', space=smem, size = 0x4, offset = 0x4, fixed_abs, tag = 'smem constant byte address 0x4 - core index']
  #allocation1 [shape = 'u32[144,128]{1,0:T(1,128)}', space=vmem, size = 0x12000, scoped, tag = 'internal scratch']
  %s0 = inlined_call_operand.vmem [shape: f32[32,128], index: 0, kind: input, shape index: {}]
  %s1 = inlined_call_operand.vmem [shape: f32[1,128], index: 1, kind: input, shape index: {}]
  %s2 = inlined_call_operand.vmem [shape: f32[1,128], index: 2, kind: input, shape index: {}]
  %s3 = inlined_call_operand.vmem [shape: f32[384,128], index: 3, kind: input, shape index: {}]
  %s4 = inlined_call_operand.vmem [shape: f32[32,128], index: 4, kind: output, shape index: {0}]
  %s5 = inlined_call_operand.vmem [shape: f32[2,1,128], index: 5, kind: output, shape index: {1}]
  %s6 = inlined_call_operand.vmem [shape: f32[2,1,128], index: 6, kind: output, shape index: {2}]
  %7 = xla_tuple %s4, %s5, %s6
  %s8 = sld [smem:[#allocation0]]
  $region65: #{residual_block.4} parent=0
    _
  %s10 = ssub.s32 1, %s8
  %s11 = scalar_select 0, %s10, %s8
  loop: start=0, step=1, limit=4
  $region2: #{residual_block.4} parent=0 // loop_pre_header
    _
  $region3: #{residual_block.4} parent=0 // loop_header
    %s13 = sphi 0, %s17
    %p14 = scmp.ge.s32.totalorder %s13, 4
    %s23 = sphi 0, %s25
    %s26 = sphi 0, %s23
    %s27 = sphi 0, %s26
    %s43 = sphi 0, %s27
    %s47 = sphi 0, %s47
    %s49 = sphi 0, %s47
    %s50 = sphi 0, %s49
    %s64 = sphi 0, %s50
    %s68 = sphi 0, %s68
    %s70 = sphi 0, %s68
    %s71 = sphi 0, %s70
    %s85 = sphi 0, %s71
    %s89 = sphi 0, %s89
    %s91 = sphi 0, %s89
    %s92 = sphi 0, %s91
    %s106 = sphi 0, %s92
    %s112 = sphi 0, %s114
    %s115 = sphi 0, %s112
    %s116 = sphi 0, %s115
    %s132 = sphi 0, %s116
    %s138 = sphi 0, %s140
    %s141 = sphi 0, %s138
    %s142 = sphi 0, %s141
    %s158 = sphi 0, %s142
    %s164 = sphi 0, %s166
    %s167 = sphi 0, %s164
    %s168 = sphi 0, %s167
    %s184 = sphi 0, %s168
  $region4: #{residual_block.4} parent=0 // loop_header_branch
    %16 = sbr.rel (%p14) target = $region8
  $region5: #{residual_block.4} parent=0 // loop_body
    %s18 = ssub.s32 %s13, 1
    %s19 = ssub.s32 %s13, 2
    %s20 = sadd.s32 %s13, 1
    %s21 = ssub.s32 %s13, %s20
    %p22 = scmp.eq.s32.totalorder %s21, 0
    %s24 = sadd.s32 %s23, 1
    %s25 = scalar_select %p22, %s23, %s24
    %p28 = pneg %p22
    %p29 = scmp.eq.s32.totalorder %s13, 1
    %p30 = por %p28, %p29
    %p31 = scmp.ne.s32.totalorder %s23, %s26
    %p32 = scmp.eq.s32.totalorder %s13, 0
    %p33 = por %p31, %p32
    %p34 = scmp.ne.s32.totalorder %s23, %s26
    %p35 = scmp.eq.s32.totalorder %s18, 1
    %p36 = por %p34, %p35
    %p37 = scmp.ne.s32.totalorder %s26, %s27
    %p38 = scmp.eq.s32.totalorder %s18, 0
    %p39 = por %p37, %p38
    %p40 = scmp.ne.s32.totalorder %s26, %s27
    %p41 = scmp.eq.s32.totalorder %s19, 1
    %p42 = por %p40, %p41
    %p44 = scmp.ne.s32.totalorder %s27, %s43
    %p45 = scmp.eq.s32.totalorder %s19, 0
    %p46 = por %p44, %p45
    %s48 = sadd.s32 %s47, 1
    %p51 = scmp.eq.s32.totalorder %s13, 1
    %p52 = scmp.ne.s32.totalorder %s47, %s49
    %p53 = scmp.eq.s32.totalorder %s13, 0
    %p54 = por %p52, %p53
    %p55 = scmp.ne.s32.totalorder %s47, %s49
    %p56 = scmp.eq.s32.totalorder %s18, 1
    %p57 = por %p55, %p56
    %p58 = scmp.ne.s32.totalorder %s49, %s50
    %p59 = scmp.eq.s32.totalorder %s18, 0
    %p60 = por %p58, %p59
    %p61 = scmp.ne.s32.totalorder %s49, %s50
    %p62 = scmp.eq.s32.totalorder %s19, 1
    %p63 = por %p61, %p62
    %p65 = scmp.ne.s32.totalorder %s50, %s64
    %p66 = scmp.eq.s32.totalorder %s19, 0
    %p67 = por %p65, %p66
    %s69 = sadd.s32 %s68, 1
    %p72 = scmp.eq.s32.totalorder %s13, 1
    %p73 = scmp.ne.s32.totalorder %s68, %s70
    %p74 = scmp.eq.s32.totalorder %s13, 0
    %p75 = por %p73, %p74
    %p76 = scmp.ne.s32.totalorder %s68, %s70
    %p77 = scmp.eq.s32.totalorder %s18, 1
    %p78 = por %p76, %p77
    %p79 = scmp.ne.s32.totalorder %s70, %s71
    %p80 = scmp.eq.s32.totalorder %s18, 0
    %p81 = por %p79, %p80
    %p82 = scmp.ne.s32.totalorder %s70, %s71
    %p83 = scmp.eq.s32.totalorder %s19, 1
    %p84 = por %p82, %p83
    %p86 = scmp.ne.s32.totalorder %s71, %s85
    %p87 = scmp.eq.s32.totalorder %s19, 0
    %p88 = por %p86, %p87
    %s90 = sadd.s32 %s89, 1
    %p93 = scmp.eq.s32.totalorder %s13, 1
    %p94 = scmp.ne.s32.totalorder %s89, %s91
    %p95 = scmp.eq.s32.totalorder %s13, 0
    %p96 = por %p94, %p95
    %p97 = scmp.ne.s32.totalorder %s89, %s91
    %p98 = scmp.eq.s32.totalorder %s18, 1
    %p99 = por %p97, %p98
    %p100 = scmp.ne.s32.totalorder %s91, %s92
    %p101 = scmp.eq.s32.totalorder %s18, 0
    %p102 = por %p100, %p101
    %p103 = scmp.ne.s32.totalorder %s91, %s92
    %p104 = scmp.eq.s32.totalorder %s19, 1
    %p105 = por %p103, %p104
    %p107 = scmp.ne.s32.totalorder %s92, %s106
    %p108 = scmp.eq.s32.totalorder %s19, 0
    %p109 = por %p107, %p108
    %s110 = ssub.s32 %s13, %s20
    %p111 = scmp.eq.s32.totalorder %s110, 0
    %s113 = sadd.s32 %s112, 1
    %s114 = scalar_select %p111, %s112, %s113
    %p117 = pneg %p111
    %p118 = scmp.eq.s32.totalorder %s13, 1
    %p119 = por %p117, %p118
    %p120 = scmp.ne.s32.totalorder %s112, %s115
    %p121 = scmp.eq.s32.totalorder %s13, 0
    %p122 = por %p120, %p121
    %p123 = scmp.ne.s32.totalorder %s112, %s115
    %p124 = scmp.eq.s32.totalorder %s18, 1
    %p125 = por %p123, %p124
    %p126 = scmp.ne.s32.totalorder %s115, %s116
    %p127 = scmp.eq.s32.totalorder %s18, 0
    %p128 = por %p126, %p127
    %p129 = scmp.ne.s32.totalorder %s115, %s116
    %p130 = scmp.eq.s32.totalorder %s19, 1
    %p131 = por %p129, %p130
    %p133 = scmp.ne.s32.totalorder %s116, %s132
    %p134 = scmp.eq.s32.totalorder %s19, 0
    %p135 = por %p133, %p134
    %s136 = ssub.s32 %s13, %s20
    %p137 = scmp.eq.s32.totalorder %s136, 0
    %s139 = sadd.s32 %s138, 1
    %s140 = scalar_select %p137, %s138, %s139
    %p143 = pneg %p137
    %p144 = scmp.eq.s32.totalorder %s13, 1
    %p145 = por %p143, %p144
    %p146 = scmp.ne.s32.totalorder %s138, %s141
    %p147 = scmp.eq.s32.totalorder %s13, 0
    %p148 = por %p146, %p147
    %p149 = scmp.ne.s32.totalorder %s138, %s141
    %p150 = scmp.eq.s32.totalorder %s18, 1
    %p151 = por %p149, %p150
    %p152 = scmp.ne.s32.totalorder %s141, %s142
    %p153 = scmp.eq.s32.totalorder %s18, 0
    %p154 = por %p152, %p153
    %p155 = scmp.ne.s32.totalorder %s141, %s142
    %p156 = scmp.eq.s32.totalorder %s19, 1
    %p157 = por %p155, %p156
    %p159 = scmp.ne.s32.totalorder %s142, %s158
    %p160 = scmp.eq.s32.totalorder %s19, 0
    %p161 = por %p159, %p160
    %s162 = ssub.s32 %s13, %s20
    %p163 = scmp.eq.s32.totalorder %s162, 0
    %s165 = sadd.s32 %s164, 1
    %s166 = scalar_select %p163, %s164, %s165
    %p169 = pneg %p163
    %p170 = scmp.eq.s32.totalorder %s13, 1
    %p171 = por %p169, %p170
    %p172 = scmp.ne.s32.totalorder %s164, %s167
    %p173 = scmp.eq.s32.totalorder %s13, 0
    %p174 = por %p172, %p173
    %p175 = scmp.ne.s32.totalorder %s164, %s167
    %p176 = scmp.eq.s32.totalorder %s18, 1
    %p177 = por %p175, %p176
    %p178 = scmp.ne.s32.totalorder %s167, %s168
    %p179 = scmp.eq.s32.totalorder %s18, 0
    %p180 = por %p178, %p179
    %p181 = scmp.ne.s32.totalorder %s167, %s168
    %p182 = scmp.eq.s32.totalorder %s19, 1
    %p183 = por %p181, %p182
    %p185 = scmp.ne.s32.totalorder %s168, %s184
    %p186 = scmp.eq.s32.totalorder %s19, 0
    %p187 = por %p185, %p186
    %p188 = scmp.le.s32.totalorder 1, %s13
    %p189 = scmp.lt.s32.totalorder %s13, 3
    %p190 = pnand %p188, %p189
    %p191 = pneg %p190
    // Predicated region
    $region9: #{residual_block.4} parent=5 // pred_check
      _
    $region10: #{residual_block.4} parent=5 // pred_check_branch
      %193 = sbr.rel (%p190) target = $region12
    $region11: #{residual_block.4} parent=5 // pred_region
      %s194 = ssub.s32 %s13, 1
      // Predicated region
      $region13: #{residual_block.4} parent=11 // pred_check
        %p195 = pneg %p60
      $region14: #{residual_block.4} parent=11 // pred_check_branch
        %197 = sbr.rel (%p195) target = $region16
      $region15: #{residual_block.4} parent=11 // pred_region
        _
      $region16: #{residual_block.4} parent=11 // pred_fallthru
        _
      // Predicated region
      $region17: #{residual_block.4} parent=11 // pred_check
        %p198 = pneg %p81
      $region18: #{residual_block.4} parent=11 // pred_check_branch
        %200 = sbr.rel (%p198) target = $region20
      $region19: #{residual_block.4} parent=11 // pred_region
        _
      $region20: #{residual_block.4} parent=11 // pred_fallthru
        _
      // Predicated region
      $region21: #{residual_block.4} parent=11 // pred_check
        %p201 = pneg %p102
      $region22: #{residual_block.4} parent=11 // pred_check_branch
        %203 = sbr.rel (%p201) target = $region24
      $region23: #{residual_block.4} parent=11 // pred_region
        _
      $region24: #{residual_block.4} parent=11 // pred_fallthru
        _
    $region12: #{residual_block.4} parent=5 // pred_fallthru
      _
    %p204 = scmp.lt.s32.totalorder %s13, 2
    // Predicated region
    $region25: #{residual_block.4} parent=5 // pred_check
      %p205 = pneg %p204
    $region26: #{residual_block.4} parent=5 // pred_check_branch
      %207 = sbr.rel (%p205) target = $region28
    $region27: #{residual_block.4} parent=5 // pred_region
      // Predicated region
      $region29: #{residual_block.4} parent=27 // pred_check
        %p208 = pneg %p33
      $region30: #{residual_block.4} parent=27 // pred_check_branch
        %210 = sbr.rel (%p208) target = $region32
      $region31: #{residual_block.4} parent=27 // pred_region
        %s211 = smul.u32 2, %s13
        %p212 = scmp.lt.s32.totalorder %s211, 3
        %s213 = scalar_select %p212, %s211, 3
        %s214 = smul.addr %s213, 8
        %s215 = scalar_lea.vmem %s0, %s214
        %s216 = smul.u32 2, %s13
      $region32: #{residual_block.4} parent=27 // pred_fallthru
        _
    $region28: #{residual_block.4} parent=5 // pred_fallthru
      _
    %p217 = scmp.le.s32.totalorder 1, %s13
    %p218 = scmp.lt.s32.totalorder %s13, 3
    %p219 = pnand %p217, %p218
    %p220 = pneg %p219
    // Predicated region
    $region33: #{residual_block.4} parent=5 // pred_check
      _
    $region34: #{residual_block.4} parent=5 // pred_check_branch
      %222 = sbr.rel (%p219) target = $region36
    $region35: #{residual_block.4} parent=5 // pred_region
      %s223 = ssub.s32 %s13, 1
      %s224 = smul.u32 2, %s18
      %p225 = scmp.lt.s32.totalorder %s224, 3
      %s226 = scalar_select %p225, %s224, 3
      %s227 = smul.addr %s226, 8
      %s228 = scalar_lea.vmem %s0, %s227
      %p229 = pneg %p39
      %p230 = pneg %p36
      %p231 = pneg %p60
      %p232 = pneg %p57
      %p233 = pneg %p81
      %p234 = pneg %p78
      %p235 = pneg %p102
      %p236 = pneg %p99
      %p237 = pneg %p128
      %p238 = pneg %p125
      %s239 = smul.u32 2, %s18
      %p240 = scmp.lt.s32.totalorder %s239, 3
      %s241 = scalar_select %p240, %s239, 3
      %s242 = smul.addr %s241, 8
      %s243 = scalar_lea.vmem %s4, %s242
      %p244 = pneg %p154
      %p245 = pneg %p151
      %p246 = scmp.lt.s32.totalorder %s18, 1
      %s247 = scalar_select %p246, %s18, 1
      %s248 = scalar_lea.vmem %s5, %s247
      %p249 = pneg %p180
      %p250 = pneg %p177
      %p251 = scmp.lt.s32.totalorder %s18, 1
      %s252 = scalar_select %p251, %s18, 1
      %s253 = scalar_lea.vmem %s6, %s252
      %s254 = smul.u32 2, %s18
      %p255 = scmp.lt.s32.totalorder %s254, 3
      %s256 = scalar_select %p255, %s254, 3
      %s257 = smul.addr %s256, 8
      %s258 = scalar_lea.vmem %s0, %s257
      %s259 = smul.u32 2, %s18
      %s260 = smul.u32 2, %s18
      %p261 = scmp.lt.s32.totalorder %s260, 3
      %s262 = scalar_select %p261, %s260, 3
      %s263 = smul.addr %s262, 8
      %s264 = scalar_lea.vmem %s4, %s263
      %s265 = smul.u32 2, %s18
      %p266 = scmp.lt.s32.totalorder %s18, 1
      %s267 = scalar_select %p266, %s18, 1
      %s268 = scalar_lea.vmem %s5, %s267
      %p269 = scmp.lt.s32.totalorder %s18, 1
      %s270 = scalar_select %p269, %s18, 1
      %s271 = scalar_lea.vmem %s6, %s270
      %v272 = vld [vmem:[%s258] sm:$0xff]
      %v273 = vld [vmem:[%s258 + $0x8] sm:$0xff]
      %v274 = vld [vmem:[%s1] sm:$0x1]
      %v276 = vlaneseq
      %v277 = vshrl.u32 %v276, 7
      %v278 = vsub.s32 0, %v277
      %v279 = vrot.slane %v274, %v278
      %v281 = vmul.f32 %v272, %v279
      %v282 = vmul.f32 %v273, %v279
      %v283 = vld [vmem:[%s2] sm:$0x1]
      %v285 = vlaneseq
      %v286 = vshrl.u32 %v285, 7
      %v287 = vsub.s32 0, %v286
      %v288 = vrot.slane %v283, %v287
      %v290 = vadd.f32 %v281, %v288
      %v291 = vadd.f32 %v282, %v288
      %v292 = vmax.f32 %v290, 0.0
      %v293 = vmax.f32 %v291, 0.0
      %vm296 = vcmask 1040384
      %v297 = vrot.slane %v292, 7
      %v298 = vrot.slane %v293, 7
      %v299 = vsel %vm296, %v297, %v298
      %v302 = vsel %vm296, 0.0, %v297
      %vm303 = vcmask 1046528
      %v304 = vrot.slane %v292, 1
      %v305 = vrot.slane %v293, 1
      %v306 = vsel %vm303, %v304, %v305
      %v309 = vsel %vm303, %v305, 0.0
      %v310 = vlaneseq
      %v311 = vshrl.u32 %v310, 7
      %v312 = vadd.s32 %v311, 8
      %vm313 = vcmp.lt.s32.totalorder %v311, 0
      %v314 = vsub.s32 0, %v311
      %v315 = vsel %vm313, %v314, %v311
      %v316 = vshrl.u32 %v315, 4
      %v317 = vand.u32 %v315, 15
      %v318 = vsub.s32 0, %v317
      %v319 = vsel %vm313, %v318, %v317
      %vm320 = vcmp.lt.s32.totalorder %v312, 0
      %v321 = vsub.s32 0, %v312
      %v322 = vsel %vm320, %v321, %v312
      %v323 = vshrl.u32 %v322, 4
      %v324 = vand.u32 %v322, 15
      %v325 = vsub.s32 0, %v324
      %v326 = vsel %vm320, %v325, %v324
      %vm327 = vcmp.ne.s32.totalorder %v319, 0
      %vm328 = vcmp.ne.s32.totalorder %v326, 0
      %vm329 = vcmp.lt.s32.totalorder %v319, 0
      %vm330 = vcmp.lt.s32.totalorder %v326, 0
      %vm331 = vmand %vm329, %vm327
      %vm332 = vmand %vm330, %vm328
      %v333 = vadd.s32 %v319, 16
      %v334 = vadd.s32 %v326, 16
      %v335 = vsel %vm331, %v333, %v319
      %v336 = vsel %vm332, %v334, %v326
      %vm337 = vcmp.eq.s32.totalorder %v335, 0
      %vm338 = vcmp.eq.s32.totalorder %v336, 0
      %v339 = vsel %vm337, 1, 0
      %v340 = vsel %vm338, 1, 0
      %vm341 = vcmp.eq.s32.totalorder %v339, 1
      %vm342 = vcmp.eq.s32.totalorder %v340, 1
      %v343 = vsel %vm341, 0.0, %v302
      %v344 = vsel %vm342, 0.0, %v299
      %vm345 = vcmp.eq.s32.totalorder %v335, 15
      %vm346 = vcmp.eq.s32.totalorder %v336, 15
      %v347 = vsel %vm345, 1, 0
      %v348 = vsel %vm346, 1, 0
      %vm349 = vcmp.eq.s32.totalorder %v347, 1
      %vm350 = vcmp.eq.s32.totalorder %v348, 1
      %v351 = vsel %vm349, 0.0, %v306
      %v352 = vsel %vm350, 0.0, %v309
      %v353 = vld [vmem:[%s3] sm:$0xff]
      %v354 = vld [vmem:[%s3 + $0x8] sm:$0xff]
      %v355 = vld [vmem:[%s3 + $0x10] sm:$0xff]
      %v356 = vld [vmem:[%s3 + $0x18] sm:$0xff]
      %v357 = vld [vmem:[%s3 + $0x20] sm:$0xff]
      %v358 = vld [vmem:[%s3 + $0x28] sm:$0xff]
      %v359 = vld [vmem:[%s3 + $0x30] sm:$0xff]
      %v360 = vld [vmem:[%s3 + $0x38] sm:$0xff]
      %v361 = vld [vmem:[%s3 + $0x40] sm:$0xff]
      %v362 = vld [vmem:[%s3 + $0x48] sm:$0xff]
      %v363 = vld [vmem:[%s3 + $0x50] sm:$0xff]
      %v364 = vld [vmem:[%s3 + $0x58] sm:$0xff]
      %v365 = vld [vmem:[%s3 + $0x60] sm:$0xff]
      %v366 = vld [vmem:[%s3 + $0x68] sm:$0xff]
      %v367 = vld [vmem:[%s3 + $0x70] sm:$0xff]
      %v368 = vld [vmem:[%s3 + $0x78] sm:$0xff]
      %v369 = vld [vmem:[%s3 + $0x80] sm:$0xff]
      %v370 = vld [vmem:[%s3 + $0x88] sm:$0xff]
      %v371 = vld [vmem:[%s3 + $0x90] sm:$0xff]
      %v372 = vld [vmem:[%s3 + $0x98] sm:$0xff]
      %v373 = vld [vmem:[%s3 + $0xa0] sm:$0xff]
      %v374 = vld [vmem:[%s3 + $0xa8] sm:$0xff]
      %v375 = vld [vmem:[%s3 + $0xb0] sm:$0xff]
      %v376 = vld [vmem:[%s3 + $0xb8] sm:$0xff]
      %v377 = vld [vmem:[%s3 + $0xc0] sm:$0xff]
      %v378 = vld [vmem:[%s3 + $0xc8] sm:$0xff]
      %v379 = vld [vmem:[%s3 + $0xd0] sm:$0xff]
      %v380 = vld [vmem:[%s3 + $0xd8] sm:$0xff]
      %v381 = vld [vmem:[%s3 + $0xe0] sm:$0xff]
      %v382 = vld [vmem:[%s3 + $0xe8] sm:$0xff]
      %v383 = vld [vmem:[%s3 + $0xf0] sm:$0xff]
      %v384 = vld [vmem:[%s3 + $0xf8] sm:$0xff]
      %v385 = vld [vmem:[%s3 + $0x100] sm:$0xff]
      %v386 = vld [vmem:[%s3 + $0x108] sm:$0xff]
      %v387 = vld [vmem:[%s3 + $0x110] sm:$0xff]
      %v388 = vld [vmem:[%s3 + $0x118] sm:$0xff]
      %v389 = vld [vmem:[%s3 + $0x120] sm:$0xff]
      %v390 = vld [vmem:[%s3 + $0x128] sm:$0xff]
      %v391 = vld [vmem:[%s3 + $0x130] sm:$0xff]
      %v392 = vld [vmem:[%s3 + $0x138] sm:$0xff]
      %v393 = vld [vmem:[%s3 + $0x140] sm:$0xff]
      %v394 = vld [vmem:[%s3 + $0x148] sm:$0xff]
      %v395 = vld [vmem:[%s3 + $0x150] sm:$0xff]
      %v396 = vld [vmem:[%s3 + $0x158] sm:$0xff]
      %v397 = vld [vmem:[%s3 + $0x160] sm:$0xff]
      %v398 = vld [vmem:[%s3 + $0x168] sm:$0xff]
      %v399 = vld [vmem:[%s3 + $0x170] sm:$0xff]
      %v400 = vld [vmem:[%s3 + $0x178] sm:$0xff]
      %401 = vmatprep.subr.mxu0 0.0
      %402 = vmatpush1.msra.mxu0 %v353
      %403 = vmatprep.subr.mxu0 0.0
      %404 = vmatpush1.msra.mxu0 %v354
      %405 = vmatprep.subr.mxu0 0.0
      %406 = vmatpush1.msra.mxu0 %v355
      %407 = vmatprep.subr.mxu0 0.0
      %408 = vmatpush1.msra.mxu0 %v356
      %409 = vmatprep.subr.mxu0 0.0
      %410 = vmatpush1.msra.mxu0 %v357
      %411 = vmatprep.subr.mxu0 0.0
      %412 = vmatpush1.msra.mxu0 %v358
      %413 = vmatprep.subr.mxu0 0.0
      %414 = vmatpush1.msra.mxu0 %v359
      %415 = vmatprep.subr.mxu0 0.0
      %416 = vmatpush1.msra.mxu0 %v360
      %417 = vmatprep.subr.mxu0 0.0
      %418 = vmatpush1.msra.mxu0 %v361
      %419 = vmatprep.subr.mxu0 0.0
      %420 = vmatpush1.msra.mxu0 %v362
      %421 = vmatprep.subr.mxu0 0.0
      %422 = vmatpush1.msra.mxu0 %v363
      %423 = vmatprep.subr.mxu0 0.0
      %424 = vmatpush1.msra.mxu0 %v364
      %425 = vmatprep.subr.mxu0 0.0
      %426 = vmatpush1.msra.mxu0 %v365
      %427 = vmatprep.subr.mxu0 0.0
      %428 = vmatpush1.msra.mxu0 %v366
      %429 = vmatprep.subr.mxu0 0.0
      %430 = vmatpush1.msra.mxu0 %v367
      %431 = vmatprep.subr.mxu0 0.0
      %432 = vmatpush1.msra.mxu0 %v368
      %433 = vmatprep.subr.mxu0 0.0
      %434 = vmatpush1.msra.mxu0 %v369
      %435 = vmatprep.subr.mxu0 0.0
      %436 = vmatpush1.msra.mxu0 %v370
      %437 = vmatprep.subr.mxu0 0.0
      %438 = vmatpush1.msra.mxu0 %v371
      %439 = vmatprep.subr.mxu0 0.0
      %440 = vmatpush1.msra.mxu0 %v372
      %441 = vmatprep.subr.mxu0 0.0
      %442 = vmatpush1.msra.mxu0 %v373
      %443 = vmatprep.subr.mxu0 0.0
      %444 = vmatpush1.msra.mxu0 %v374
      %445 = vmatprep.subr.mxu0 0.0
      %446 = vmatpush1.msra.mxu0 %v375
      %447 = vmatprep.subr.mxu0 0.0
      %448 = vmatpush1.msra.mxu0 %v376
      %449 = vmatprep.subr.mxu0 0.0
      %450 = vmatpush1.msra.mxu0 %v377
      %451 = vmatprep.subr.mxu0 0.0
      %452 = vmatpush1.msra.mxu0 %v378
      %453 = vmatprep.subr.mxu0 0.0
      %454 = vmatpush1.msra.mxu0 %v379
      %455 = vmatprep.subr.mxu0 0.0
      %456 = vmatpush1.msra.mxu0 %v380
      %457 = vmatprep.subr.mxu0 0.0
      %458 = vmatpush1.msra.mxu0 %v381
      %459 = vmatprep.subr.mxu0 0.0
      %460 = vmatpush1.msra.mxu0 %v382
      %461 = vmatprep.subr.mxu0 0.0
      %462 = vmatpush1.msra.mxu0 %v383
      %463 = vmatprep.subr.mxu0 0.0
      %464 = vmatpush1.msra.mxu0 %v384
      %465 = vmatprep.mubr.f32.mxu0 %v292
      %466 = vmatmul.mubr.f32.gmra.mrb[0].mxu0 %v343
      %v467 = vpop.f32.mrb[0].mxu0
      %v468 = vadd.f32 0.0, %v467
      %v469 = vpop.f32.mrb[0].mxu0
      %470 = vmatprep.mubr.f32.mxu0 %v293
      %471 = vmatmul.mubr.f32.gmra.mrb[0].mxu0 %v344
      %v472 = vpop.f32.mrb[0].mxu0
      %v473 = vadd.f32 0.0, %v472
      %v474 = vpop.f32.mrb[0].mxu0
      %475 = vdwg.mxu0
      %476 = vmatprep.subr.mxu0 0.0
      %477 = vmatpush1.msra.mxu0 %v385
      %478 = vmatprep.subr.mxu0 0.0
      %479 = vmatpush1.msra.mxu0 %v386
      %480 = vmatprep.subr.mxu0 0.0
      %481 = vmatpush1.msra.mxu0 %v387
      %482 = vmatprep.subr.mxu0 0.0
      %483 = vmatpush1.msra.mxu0 %v388
      %484 = vmatprep.subr.mxu0 0.0
      %485 = vmatpush1.msra.mxu0 %v389
      %486 = vmatprep.subr.mxu0 0.0
      %487 = vmatpush1.msra.mxu0 %v390
      %488 = vmatprep.subr.mxu0 0.0
      %489 = vmatpush1.msra.mxu0 %v391
      %490 = vmatprep.subr.mxu0 0.0
      %491 = vmatpush1.msra.mxu0 %v392
      %492 = vmatprep.subr.mxu0 0.0
      %493 = vmatpush1.msra.mxu0 %v393
      %494 = vmatprep.subr.mxu0 0.0
      %495 = vmatpush1.msra.mxu0 %v394
      %496 = vmatprep.subr.mxu0 0.0
      %497 = vmatpush1.msra.mxu0 %v395
      %498 = vmatprep.subr.mxu0 0.0
      %499 = vmatpush1.msra.mxu0 %v396
      %500 = vmatprep.subr.mxu0 0.0
      %501 = vmatpush1.msra.mxu0 %v397
      %502 = vmatprep.subr.mxu0 0.0
      %503 = vmatpush1.msra.mxu0 %v398
      %504 = vmatprep.subr.mxu0 0.0
      %505 = vmatpush1.msra.mxu0 %v399
      %506 = vmatprep.subr.mxu0 0.0
      %507 = vmatpush1.msra.mxu0 %v400
      %508 = vmatprep.subr.mxu0 0.0
      %509 = vmatpush1.msra.mxu0 0.0
      %510 = vmatprep.subr.mxu0 0.0
      %511 = vmatpush1.msra.mxu0 0.0
      %512 = vmatprep.subr.mxu0 0.0
      %513 = vmatpush1.msra.mxu0 0.0
      %514 = vmatprep.subr.mxu0 0.0
      %515 = vmatpush1.msra.mxu0 0.0
      %516 = vmatprep.subr.mxu0 0.0
      %517 = vmatpush1.msra.mxu0 0.0
      %518 = vmatprep.subr.mxu0 0.0
      %519 = vmatpush1.msra.mxu0 0.0
      %520 = vmatprep.subr.mxu0 0.0
      %521 = vmatpush1.msra.mxu0 0.0
      %522 = vmatprep.subr.mxu0 0.0
      %523 = vmatpush1.msra.mxu0 0.0
      %524 = vmatprep.subr.mxu0 0.0
      %525 = vmatpush1.msra.mxu0 0.0
      %526 = vmatprep.subr.mxu0 0.0
      %527 = vmatpush1.msra.mxu0 0.0
      %528 = vmatprep.subr.mxu0 0.0
      %529 = vmatpush1.msra.mxu0 0.0
      %530 = vmatprep.subr.mxu0 0.0
      %531 = vmatpush1.msra.mxu0 0.0
      %532 = vmatprep.subr.mxu0 0.0
      %533 = vmatpush1.msra.mxu0 0.0
      %534 = vmatprep.subr.mxu0 0.0
      %535 = vmatpush1.msra.mxu0 0.0
      %536 = vmatprep.subr.mxu0 0.0
      %537 = vmatpush1.msra.mxu0 0.0
      %538 = vmatprep.subr.mxu0 0.0
      %539 = vmatpush1.msra.mxu0 0.0
      %540 = vmatprep.mubr.f32.mxu0 0.0
      %541 = vmatmul.mubr.f32.gmra.mrb[0].mxu0 %v351
      %v542 = vpop.f32.mrb[0].mxu0
      %v543 = vadd.f32 %v468, %v542
      %v544 = vpop.f32.mrb[0].mxu0
      %545 = vmatprep.mubr.f32.mxu0 0.0
      %546 = vmatmul.mubr.f32.gmra.mrb[0].mxu0 %v352
      %v547 = vpop.f32.mrb[0].mxu0
      %v548 = vadd.f32 %v473, %v547
      %v549 = vpop.f32.mrb[0].mxu0
      %550 = vdwg.mxu0
      %551 = vst [vmem:[%s264] sm:$0xff] %v543
      %552 = vst [vmem:[%s264 + $0x8] sm:$0xff] %v548
      %v553 = vadd.f32 %v543, %v548
      %v554 = vrot.slane %v553, 4
      %v555 = vadd.f32 %v553, %v554
      %v556 = vrot.slane %v555, 2
      %v557 = vadd.f32 %v555, %v556
      %v558 = vrot.slane %v557, 1
      %v559 = vadd.f32 %v557, %v558
      %560 = vst [vmem:[%s268] sm:$0x1] %v559
      %v561 = vmul.f32 %v543, %v543
      %v562 = vmul.f32 %v548, %v548
      %v563 = vadd.f32 %v561, %v562
      %v564 = vrot.slane %v563, 4
      %v565 = vadd.f32 %v563, %v564
      %v566 = vrot.slane %v565, 2
      %v567 = vadd.f32 %v565, %v566
      %v568 = vrot.slane %v567, 1
      %v569 = vadd.f32 %v567, %v568
      %570 = vst [vmem:[%s271] sm:$0x1] %v569
      %s571 = smul.u32 2, %s18
      %p572 = scmp.lt.s32.totalorder %s571, 3
      %s573 = scalar_select %p572, %s571, 3
      %s574 = smul.addr %s573, 8
      %s575 = scalar_lea.vmem %s4, %s574
      %p576 = scmp.lt.s32.totalorder %s18, 1
      %s577 = scalar_select %p576, %s18, 1
      %s578 = scalar_lea.vmem %s5, %s577
      %p579 = scmp.lt.s32.totalorder %s18, 1
      %s580 = scalar_select %p579, %s18, 1
      %s581 = scalar_lea.vmem %s6, %s580
      // Predicated region
      $region37: #{residual_block.4} parent=35 // pred_check
        %p582 = pneg %p125
      $region38: #{residual_block.4} parent=35 // pred_check_branch
        %584 = sbr.rel (%p582) target = $region40
      $region39: #{residual_block.4} parent=35 // pred_region
        %s585 = smul.u32 2, %s18
      $region40: #{residual_block.4} parent=35 // pred_fallthru
        _
      // Predicated region
      $region41: #{residual_block.4} parent=35 // pred_check
        %p586 = pneg %p151
      $region42: #{residual_block.4} parent=35 // pred_check_branch
        %588 = sbr.rel (%p586) target = $region44
      $region43: #{residual_block.4} parent=35 // pred_region
        _
      $region44: #{residual_block.4} parent=35 // pred_fallthru
        _
      // Predicated region
      $region45: #{residual_block.4} parent=35 // pred_check
        %p589 = pneg %p177
      $region46: #{residual_block.4} parent=35 // pred_check_branch
        %591 = sbr.rel (%p589) target = $region48
      $region47: #{residual_block.4} parent=35 // pred_region
        _
      $region48: #{residual_block.4} parent=35 // pred_fallthru
        _
    $region36: #{residual_block.4} parent=5 // pred_fallthru
      _
    %p592 = scmp.le.s32.totalorder 2, %s13
    // Predicated region
    $region49: #{residual_block.4} parent=5 // pred_check
      %p593 = pneg %p592
    $region50: #{residual_block.4} parent=5 // pred_check_branch
      %595 = sbr.rel (%p593) target = $region52
    $region51: #{residual_block.4} parent=5 // pred_region
      %s596 = ssub.s32 %s13, 2
      // Predicated region
      $region53: #{residual_block.4} parent=51 // pred_check
        %p597 = pneg %p131
      $region54: #{residual_block.4} parent=51 // pred_check_branch
        %599 = sbr.rel (%p597) target = $region56
      $region55: #{residual_block.4} parent=51 // pred_region
        %s600 = smul.u32 2, %s19
        %p601 = scmp.lt.s32.totalorder %s600, 3
        %s602 = scalar_select %p601, %s600, 3
        %s603 = smul.addr %s602, 8
        %s604 = scalar_lea.vmem %s4, %s603
      $region56: #{residual_block.4} parent=51 // pred_fallthru
        _
      // Predicated region
      $region57: #{residual_block.4} parent=51 // pred_check
        %p605 = pneg %p157
      $region58: #{residual_block.4} parent=51 // pred_check_branch
        %607 = sbr.rel (%p605) target = $region60
      $region59: #{residual_block.4} parent=51 // pred_region
        %p608 = scmp.lt.s32.totalorder %s19, 1
        %s609 = scalar_select %p608, %s19, 1
        %s610 = scalar_lea.vmem %s5, %s609
      $region60: #{residual_block.4} parent=51 // pred_fallthru
        _
      // Predicated region
      $region61: #{residual_block.4} parent=51 // pred_check
        %p611 = pneg %p183
      $region62: #{residual_block.4} parent=51 // pred_check_branch
        %613 = sbr.rel (%p611) target = $region64
      $region63: #{residual_block.4} parent=51 // pred_region
        %p614 = scmp.lt.s32.totalorder %s19, 1
        %s615 = scalar_select %p614, %s19, 1
        %s616 = scalar_lea.vmem %s6, %s615
      $region64: #{residual_block.4} parent=51 // pred_fallthru
        _
    $region52: #{residual_block.4} parent=5 // pred_fallthru
      _
  $region6: #{residual_block.4} parent=0 // loop_footer
    %s17 = sadd.s32 1, %s13
  $region7: #{residual_block.4} parent=0 // loop_footer_branch
    %12 = sbr.rel target = $region3
  $region8: #{residual_block.4} parent=0 // loop_exit
    _

</llo_original>
